<compile_context>
chip_gen: v7x
topology: tpu7x:2x2x1
jax: 0.10.0
libtpu: 0.0.40
codegen_flags: <defaults>
</compile_context>

<pallas_src>
import jax
import jax.numpy as jnp
from jax.experimental import pallas as pl
from jax.experimental.pallas import tpu as pltpu

H1, H2, OUT, OUT_PAD = 1024, 256, 5, 128


def _round_up(n, m):
    return ((n + m - 1) // m) * m


def _mlp_kernel(x_ref, w1_ref, b1_ref, w2_ref, b2_ref, w3_ref, b3_ref,
                o_ref, acc_ref):
    k = pl.program_id(1)

    @pl.when(k == 0)
    def _init():
        acc_ref[...] = jnp.zeros_like(acc_ref)

    # Layer 1 partial product: (TM, TK) @ (TK, 1024), f32 accumulation on MXU.
    acc_ref[...] += jnp.dot(x_ref[...], w1_ref[...],
                            preferred_element_type=jnp.float32)

    @pl.when(k == pl.num_programs(1) - 1)
    def _finalize():
        # Bias + ReLU in f32.
        # TODO(synk): Dropout2d(p=0.5) is identity in eval mode; training-mode
        # RNG masking is not implemented here.
        h1 = jnp.maximum(acc_ref[...] + b1_ref[...], 0.0)
        # Layer 2: Linear(1024, 256), bf16 MXU inputs, f32 accumulate.
        h2 = jnp.dot(h1.astype(w2_ref.dtype), w2_ref[...],
                     preferred_element_type=jnp.float32) + b2_ref[...]
        # Layer 3: Linear(256, 5) padded to lane-dense 128 output columns.
        h3 = jnp.dot(h2.astype(w3_ref.dtype), w3_ref[...],
                     preferred_element_type=jnp.float32) + b3_ref[...]
        o_ref[...] = h3.astype(o_ref.dtype)


def mydnnnet_forward(x_nchw, params):
    """x_nchw: (B, C, H, W) float32. params: w1 (D,1024), b1 (1,1024),
    w2 (1024,256), b2 (1,256), w3 (256,5), b3 (1,5). Returns (B, 5) f32."""
    B = x_nchw.shape[0]
    x = x_nchw.reshape(B, -1)                 # row-major flatten == torch .view
    D = x.shape[1]

    # bf16 weight / activation streaming (f32 accumulation in-kernel).
    w1 = params["w1"].astype(jnp.bfloat16)
    w2 = params["w2"].astype(jnp.bfloat16)
    w3 = params["w3"].astype(jnp.bfloat16)
    b1 = params["b1"].astype(jnp.float32)
    b2 = params["b2"].astype(jnp.float32)
    b3 = params["b3"].astype(jnp.float32)

    # Lane-dense final layer: zero-pad out-features 5 -> 128.
    w3p = jnp.zeros((H2, OUT_PAD), jnp.bfloat16).at[:, :OUT].set(w3)
    b3p = jnp.zeros((1, OUT_PAD), jnp.float32).at[:, :OUT].set(b3)

    # Batch tiling: pad B to a bf16-sublane multiple; TM up to 256.
    B_pad = _round_up(B, 16)
    TM = min(256, B_pad)
    B_pad = _round_up(B_pad, TM)

    # K tiling over the layer-1 contraction: pad D to a lane multiple; TK <= 512.
    D_pad = _round_up(D, 128)
    TK = min(512, D_pad)
    D_pad = _round_up(D_pad, TK)

    xb = jnp.zeros((B_pad, D_pad), jnp.bfloat16).at[:B, :D].set(
        x.astype(jnp.bfloat16))
    w1p = jnp.zeros((D_pad, H1), jnp.bfloat16).at[:D, :].set(w1)

    grid = (B_pad // TM, D_pad // TK)

    # Advisory cost estimate so XLA can overlap neighbouring ops.
    flops = 2 * B_pad * (D_pad * H1 + H1 * H2 + H2 * OUT_PAD)
    bytes_accessed = ((xb.size + w1p.size + w2.size + w3p.size) * 2
                      + (b1.size + b2.size + b3p.size + B_pad * OUT_PAD) * 4)
    cost = pl.CostEstimate(flops=flops, transcendentals=0,
                           bytes_accessed=bytes_accessed)

    # Scoped VMEM sized to need (double-buffered streamed tiles + resident
    # small weights + f32 accumulator), with margin; capped well below v7x's
    # 64 MiB physical per-TC VMEM.
    vmem_need = (
        2 * (TM * TK + TK * H1) * 2        # double-buffered x / w1 tiles (bf16)
        + (H1 * H2 + H2 * OUT_PAD) * 2     # resident w2 / w3 (bf16)
        + (H1 + H2 + OUT_PAD) * 4          # biases (f32)
        + TM * H1 * 4                      # layer-1 accumulator scratch
        + 2 * TM * OUT_PAD * 4             # double-buffered output (f32)
    )
    vmem_limit = max(16 << 20, min(2 * vmem_need + (4 << 20), 48 << 20))

    out_pad = pl.pallas_call(
        _mlp_kernel,
        out_shape=jax.ShapeDtypeStruct((B_pad, OUT_PAD), jnp.float32),
        grid_spec=pltpu.PrefetchScalarGridSpec(
            num_scalar_prefetch=0,
            grid=grid,
            in_specs=[
                pl.BlockSpec((TM, TK), lambda i, k: (i, k)),        # x tile
                pl.BlockSpec((TK, H1), lambda i, k: (k, 0)),        # w1 tile
                pl.BlockSpec((1, H1), lambda i, k: (0, 0)),         # b1 (resident)
                pl.BlockSpec((H1, H2), lambda i, k: (0, 0)),        # w2 (resident)
                pl.BlockSpec((1, H2), lambda i, k: (0, 0)),         # b2 (resident)
                pl.BlockSpec((H2, OUT_PAD), lambda i, k: (0, 0)),   # w3 padded
                pl.BlockSpec((1, OUT_PAD), lambda i, k: (0, 0)),    # b3 padded
            ],
            out_specs=pl.BlockSpec((TM, OUT_PAD), lambda i, k: (i, 0)),
            scratch_shapes=[pltpu.VMEM((TM, H1), jnp.float32)],
        ),
        compiler_params=pltpu.CompilerParams(
            dimension_semantics=("parallel", "arbitrary"),
            vmem_limit_bytes=vmem_limit),
        cost_estimate=cost,
    )(xb, w1p, b1, w2, b2, w3p, b3p)

    return out_pad[:B, :OUT]


def init_params(key, input_size):
    """Deterministic init matching PyTorch Linear default U(-1/sqrt(in), 1/sqrt(in)).
    Weights stored transposed: (in_features, out_features)."""
    dims = [(input_size, H1), (H1, H2), (H2, OUT)]
    params = {}
    keys = jax.random.split(key, 2 * len(dims))
    for i, (fin, fout) in enumerate(dims):
        bound = 1.0 / (fin ** 0.5)
        params[f"w{i+1}"] = jax.random.uniform(
            keys[2 * i], (fin, fout), jnp.float32, minval=-bound, maxval=bound)
        params[f"b{i+1}"] = jax.random.uniform(
            keys[2 * i + 1], (1, fout), jnp.float32, minval=-bound, maxval=bound)
    return params


if __name__ == "__main__":
    key = jax.random.PRNGKey(0)
    kx, kp = jax.random.split(key)

    # Small shapes: batch=2, channels=4, spatial=16 -> input_size = 4*16*16 = 1024
    B, C, H, W = 2, 4, 16, 16
    input_size = C * H * W

    x = jax.random.normal(kx, (B, C, H, W), jnp.float32)
    params = init_params(kp, input_size)

    fwd = jax.jit(mydnnnet_forward)
    out = jax.block_until_ready(fwd(x, params))
    assert out.shape == (B, OUT)

    # Sanity-check against a plain JAX reference using the same bf16 weights /
    # intermediate casts as the kernel (f32 accumulation).
    f32 = jnp.float32
    xf = x.reshape(B, -1).astype(jnp.bfloat16).astype(f32)
    w1f = params["w1"].astype(jnp.bfloat16).astype(f32)
    w2f = params["w2"].astype(jnp.bfloat16).astype(f32)
    w3f = params["w3"].astype(jnp.bfloat16).astype(f32)
    h1 = jnp.maximum(xf @ w1f + params["b1"], 0.0)
    h2 = h1.astype(jnp.bfloat16).astype(f32) @ w2f + params["b2"]
    ref = h2.astype(jnp.bfloat16).astype(f32) @ w3f + params["b3"]
    assert jnp.allclose(out, ref, atol=2e-2, rtol=2e-2), (
        f"max abs err = {jnp.max(jnp.abs(out - ref))}")

    print("KERNEL_OK")
</pallas_src>

<mosaic_0001>
module attributes {stable_mosaic.version = 11 : i64} {
  func.func @_mlp_kernel(%arg0: i32, %arg1: i32, %arg2: memref<16x512xbf16, #tpu.memory_space<vmem>>, %arg3: memref<512x1024xbf16, #tpu.memory_space<vmem>>, %arg4: memref<1x1024xf32, #tpu.memory_space<vmem>>, %arg5: memref<1024x256xbf16, #tpu.memory_space<vmem>>, %arg6: memref<1x256xf32, #tpu.memory_space<vmem>>, %arg7: memref<256x128xbf16, #tpu.memory_space<vmem>>, %arg8: memref<1x128xf32, #tpu.memory_space<vmem>>, %arg9: memref<16x128xf32, #tpu.memory_space<vmem>>, %arg10: memref<16x1024xf32, #tpu.memory_space<vmem>>) attributes {dimension_semantics = [#tpu.dimension_semantics<parallel>, #tpu.dimension_semantics<arbitrary>], iteration_bounds = array<i64: 1, 2>, scalar_prefetch = 0 : i64, scratch_operands = 1 : i64, tpu.core_type = #tpu.core_type<tc>, window_params = [{transform_indices = @transform_0, window_bounds = array<i64: 16, 512>}, {transform_indices = @transform_1, window_bounds = array<i64: 512, 1024>}, {pipeline_mode = #tpu.pipeline_mode<synchronous>, transform_indices = @transform_2, window_bounds = array<i64: 1, 1024>}, {pipeline_mode = #tpu.pipeline_mode<synchronous>, transform_indices = @transform_3, window_bounds = array<i64: 1024, 256>}, {pipeline_mode = #tpu.pipeline_mode<synchronous>, transform_indices = @transform_4, window_bounds = array<i64: 1, 256>}, {pipeline_mode = #tpu.pipeline_mode<synchronous>, transform_indices = @transform_5, window_bounds = array<i64: 256, 128>}, {pipeline_mode = #tpu.pipeline_mode<synchronous>, transform_indices = @transform_6, window_bounds = array<i64: 1, 128>}, {transform_indices = @transform_7, window_bounds = array<i64: 16, 128>}]} {
    %c0_i32 = arith.constant 0 : i32
    %0 = arith.cmpi eq, %arg1, %c0_i32 : i32
    %1 = arith.extui %0 : i1 to i32
    %c0_i32_0 = arith.constant 0 : i32
    %2 = arith.cmpi ne, %1, %c0_i32_0 : i32
    scf.if %2 {
      %cst_9 = arith.constant 0.000000e+00 : f32
      %12 = vector.broadcast %cst_9 : f32 to vector<16x1024xf32>
      %c0_10 = arith.constant 0 : index
      %c0_11 = arith.constant 0 : index
      %13 = vector.load %arg10[%c0_10, %c0_11] : memref<16x1024xf32, #tpu.memory_space<vmem>>, vector<16x1024xf32>
      tpu.vector_store %arg10[%c0_10, %c0_11], %12 {strides = array<i32>} : memref<16x1024xf32, #tpu.memory_space<vmem>>, vector<16x1024xf32>,
    } else {
    }
    %c0 = arith.constant 0 : index
    %c0_1 = arith.constant 0 : index
    %3 = vector.load %arg10[%c0, %c0_1] : memref<16x1024xf32, #tpu.memory_space<vmem>>, vector<16x1024xf32>
    %c0_2 = arith.constant 0 : index
    %c0_3 = arith.constant 0 : index
    %4 = vector.load %arg2[%c0_2, %c0_3] : memref<16x512xbf16, #tpu.memory_space<vmem>>, vector<16x512xbf16>
    %c0_4 = arith.constant 0 : index
    %c0_5 = arith.constant 0 : index
    %5 = vector.load %arg3[%c0_4, %c0_5] : memref<512x1024xbf16, #tpu.memory_space<vmem>>, vector<512x1024xbf16>
    %cst = arith.constant dense<0.000000e+00> : vector<16x1024xf32>
    %6 = tpu.matmul %4, %5, %cst {dimension_numbers = #tpu.dot_dimension_numbers<[1], [0], [0], [1], [0, 0, 1, 1], [], []>} : vector<16x512xbf16>, vector<512x1024xbf16>, vector<16x1024xf32> -> vector<16x1024xf32>
    %7 = arith.addf %3, %6 : vector<16x1024xf32>
    %c0_6 = arith.constant 0 : index
    %c0_7 = arith.constant 0 : index
    %8 = vector.load %arg10[%c0_6, %c0_7] : memref<16x1024xf32, #tpu.memory_space<vmem>>, vector<16x1024xf32>
    tpu.vector_store %arg10[%c0_6, %c0_7], %7 {strides = array<i32>} : memref<16x1024xf32, #tpu.memory_space<vmem>>, vector<16x1024xf32>,
    %c1_i32 = arith.constant 1 : i32
    %9 = arith.cmpi eq, %arg1, %c1_i32 : i32
    %10 = arith.extui %9 : i1 to i32
    %c0_i32_8 = arith.constant 0 : i32
    %11 = arith.cmpi ne, %10, %c0_i32_8 : i32
    scf.if %11 {
      %c0_9 = arith.constant 0 : index
      %c0_10 = arith.constant 0 : index
      %12 = vector.load %arg10[%c0_9, %c0_10] : memref<16x1024xf32, #tpu.memory_space<vmem>>, vector<16x1024xf32>
      %c0_11 = arith.constant 0 : index
      %c0_12 = arith.constant 0 : index
      %13 = vector.load %arg4[%c0_11, %c0_12] : memref<1x1024xf32, #tpu.memory_space<vmem>>, vector<1x1024xf32>
      %14 = vector.broadcast %13 : vector<1x1024xf32> to vector<16x1024xf32>
      %15 = arith.addf %12, %14 : vector<16x1024xf32>
      %cst_13 = arith.constant 0.000000e+00 : f32
      %16 = vector.broadcast %cst_13 : f32 to vector<16x1024xf32>
      %17 = arith.maximumf %15, %16 : vector<16x1024xf32>
      %18 = arith.truncf %17 : vector<16x1024xf32> to vector<16x1024xbf16>
      %c0_14 = arith.constant 0 : index
      %c0_15 = arith.constant 0 : index
      %19 = vector.load %arg5[%c0_14, %c0_15] : memref<1024x256xbf16, #tpu.memory_space<vmem>>, vector<1024x256xbf16>
      %cst_16 = arith.constant dense<0.000000e+00> : vector<16x256xf32>
      %20 = tpu.matmul %18, %19, %cst_16 {dimension_numbers = #tpu.dot_dimension_numbers<[1], [0], [0], [1], [0, 0, 1, 1], [], []>} : vector<16x1024xbf16>, vector<1024x256xbf16>, vector<16x256xf32> -> vector<16x256xf32>
      %c0_17 = arith.constant 0 : index
      %c0_18 = arith.constant 0 : index
      %21 = vector.load %arg6[%c0_17, %c0_18] : memref<1x256xf32, #tpu.memory_space<vmem>>, vector<1x256xf32>
      %22 = vector.broadcast %21 : vector<1x256xf32> to vector<16x256xf32>
      %23 = arith.addf %20, %22 : vector<16x256xf32>
      %24 = arith.truncf %23 : vector<16x256xf32> to vector<16x256xbf16>
      %c0_19 = arith.constant 0 : index
      %c0_20 = arith.constant 0 : index
      %25 = vector.load %arg7[%c0_19, %c0_20] : memref<256x128xbf16, #tpu.memory_space<vmem>>, vector<256x128xbf16>
      %cst_21 = arith.constant dense<0.000000e+00> : vector<16x128xf32>
      %26 = tpu.matmul %24, %25, %cst_21 {dimension_numbers = #tpu.dot_dimension_numbers<[1], [0], [0], [1], [0, 0, 1, 1], [], []>} : vector<16x256xbf16>, vector<256x128xbf16>, vector<16x128xf32> -> vector<16x128xf32>
      %c0_22 = arith.constant 0 : index
      %c0_23 = arith.constant 0 : index
      %27 = vector.load %arg8[%c0_22, %c0_23] : memref<1x128xf32, #tpu.memory_space<vmem>>, vector<1x128xf32>
      %28 = vector.broadcast %27 : vector<1x128xf32> to vector<16x128xf32>
      %29 = arith.addf %26, %28 : vector<16x128xf32>
      %c0_24 = arith.constant 0 : index
      %c0_25 = arith.constant 0 : index
      %30 = vector.load %arg9[%c0_24, %c0_25] : memref<16x128xf32, #tpu.memory_space<vmem>>, vector<16x128xf32>
      tpu.vector_store %arg9[%c0_24, %c0_25], %29 {strides = array<i32>} : memref<16x128xf32, #tpu.memory_space<vmem>>, vector<16x128xf32>,
    } else {
    }
    return
  }
  func.func @transform_0(%arg0: i32, %arg1: i32) -> (i32, i32) {
    %c0_i32 = arith.constant 0 : i32
    return %arg0, %arg1 : i32, i32
  }
  func.func @transform_1(%arg0: i32, %arg1: i32) -> (i32, i32) {
    %c0_i32 = arith.constant 0 : i32
    %c0_i32_0 = arith.constant 0 : i32
    return %arg1, %c0_i32 : i32, i32
  }
  func.func @transform_2(%arg0: i32, %arg1: i32) -> (i32, i32) {
    %c0_i32 = arith.constant 0 : i32
    %c0_i32_0 = arith.constant 0 : i32
    %c0_i32_1 = arith.constant 0 : i32
    return %c0_i32, %c0_i32_0 : i32, i32
  }
  func.func @transform_3(%arg0: i32, %arg1: i32) -> (i32, i32) {
    %c0_i32 = arith.constant 0 : i32
    %c0_i32_0 = arith.constant 0 : i32
    %c0_i32_1 = arith.constant 0 : i32
    return %c0_i32, %c0_i32_0 : i32, i32
  }
  func.func @transform_4(%arg0: i32, %arg1: i32) -> (i32, i32) {
    %c0_i32 = arith.constant 0 : i32
    %c0_i32_0 = arith.constant 0 : i32
    %c0_i32_1 = arith.constant 0 : i32
    return %c0_i32, %c0_i32_0 : i32, i32
  }
  func.func @transform_5(%arg0: i32, %arg1: i32) -> (i32, i32) {
    %c0_i32 = arith.constant 0 : i32
    %c0_i32_0 = arith.constant 0 : i32
    %c0_i32_1 = arith.constant 0 : i32
    return %c0_i32, %c0_i32_0 : i32, i32
  }
  func.func @transform_6(%arg0: i32, %arg1: i32) -> (i32, i32) {
    %c0_i32 = arith.constant 0 : i32
    %c0_i32_0 = arith.constant 0 : i32
    %c0_i32_1 = arith.constant 0 : i32
    return %c0_i32, %c0_i32_0 : i32, i32
  }
  func.func @transform_7(%arg0: i32, %arg1: i32) -> (i32, i32) {
    %c0_i32 = arith.constant 0 : i32
    %c0_i32_0 = arith.constant 0 : i32
    return %arg0, %c0_i32 : i32, i32
  }
}

</mosaic_0001>

<llo_original>
// kernel: mydnnnet_forward.1
$region0: #{mydnnnet_forward.1}
  #allocation0 [shape = 'u32[]', space=smem, size = 0x4, offset = 0x4, fixed_abs, tag = 'smem constant byte address 0x4 - core index']
  #allocation1 [shape = 'u32[144,128]{1,0:T(1,128)}', space=vmem, size = 0x12000, scoped, tag = 'internal scratch']
  #allocation2 [shape = 'f32[16,1024]{1,0:T(8,128)}', space=vmem, size = 0x10000, scoped, tag = 'scratch operand']
  %s0 = inlined_call_operand.vmem [shape: bf16[16,1024], index: 0, kind: input, shape index: {}]
  %s1 = inlined_call_operand.vmem [shape: bf16[1024,1024], index: 1, kind: input, shape index: {}]
  %s2 = inlined_call_operand.vmem [shape: f32[1,1024], index: 2, kind: input, shape index: {}]
  %s3 = inlined_call_operand.vmem [shape: bf16[1024,256], index: 3, kind: input, shape index: {}]
  %s4 = inlined_call_operand.vmem [shape: f32[1,256], index: 4, kind: input, shape index: {}]
  %s5 = inlined_call_operand.vmem [shape: bf16[256,128], index: 5, kind: input, shape index: {}]
  %s6 = inlined_call_operand.vmem [shape: f32[1,128], index: 6, kind: input, shape index: {}]
  %s7 = inlined_call_operand.vmem [shape: f32[16,128], index: 7, kind: output, shape index: {}]
  %s8 = sld [smem:[#allocation0]]
  $region92: #{mydnnnet_forward.1} parent=0
    _
  %s10 = ssub.s32 1, %s8
  %s11 = scalar_select 0, %s10, %s8
  $region1: #{mydnnnet_forward.1} parent=0
    #allocation3 [shape = 'u8[32768]{0}', space=vmem, size = 0x8000, scoped, tag = 'input window, operand 0']
    loop: start=0, step=1, limit=4
    $region2: #{mydnnnet_forward.1} parent=1 // loop_pre_header
      _
    $region3: #{mydnnnet_forward.1} parent=1 // loop_header
      %s13 = sphi 0, %s17
      %p14 = scmp.ge.s32.totalorder %s13, 4
      %s20 = sphi 0, %s32
      %s21 = sphi 0, %s28
      %s22 = sphi 0, %s20
      %s23 = sphi 0, %s21
      %s24 = sphi 0, %s22
      %s25 = sphi 0, %s23
      %s37 = sphi 0, %s39
      %s40 = sphi 0, %s37
      %s41 = sphi 0, %s40
      %s57 = sphi 0, %s41
      %s63 = sphi 0, %s65
      %s66 = sphi 0, %s63
      %s67 = sphi 0, %s66
      %s83 = sphi 0, %s67
      %s87 = sphi 0, %s87
      %s89 = sphi 0, %s87
      %s90 = sphi 0, %s89
      %s104 = sphi 0, %s90
      %s108 = sphi 0, %s108
      %s110 = sphi 0, %s108
      %s111 = sphi 0, %s110
      %s125 = sphi 0, %s111
      %s129 = sphi 0, %s129
      %s131 = sphi 0, %s129
      %s132 = sphi 0, %s131
      %s146 = sphi 0, %s132
      %s150 = sphi 0, %s150
      %s152 = sphi 0, %s150
      %s153 = sphi 0, %s152
      %s167 = sphi 0, %s153
      %s171 = sphi 0, %s171
      %s173 = sphi 0, %s171
      %s174 = sphi 0, %s173
      %s188 = sphi 0, %s174
      %s194 = sphi 0, %s196
      %s197 = sphi 0, %s194
      %s198 = sphi 0, %s197
      %s214 = sphi 0, %s198
    $region4: #{mydnnnet_forward.1} parent=1 // loop_header_branch
      %16 = sbr.rel (%p14) target = $region8
    $region5: #{mydnnnet_forward.1} parent=1 // loop_body
      %s18 = ssub.s32 %s13, 1
      %s19 = ssub.s32 %s13, 2
      %s26 = sadd.s32 1, %s21
      %p27 = scmp.ge.s32.totalorder %s26, 2
      %s28 = scalar_select %p27, 0, %s26
      %s29 = sadd.s32 1, %s20
      %s30 = scalar_select %p27, %s29, %s20
      %p31 = scmp.ge.s32.totalorder %s30, 1
      %s32 = scalar_select %p31, 0, %s30
      %s33 = ssub.s32 %s20, %s32
      %s34 = ssub.s32 %s21, %s28
      %s35 = sor.u32 %s33, %s34
      %p36 = scmp.eq.s32.totalorder %s35, 0
      %s38 = sadd.s32 %s37, 1
      %s39 = scalar_select %p36, %s37, %s38
      %p42 = pneg %p36
      %p43 = scmp.eq.s32.totalorder %s13, 1
      %p44 = por %p42, %p43
      %p45 = scmp.ne.s32.totalorder %s37, %s40
      %p46 = scmp.eq.s32.totalorder %s13, 0
      %p47 = por %p45, %p46
      %p48 = scmp.ne.s32.totalorder %s37, %s40
      %p49 = scmp.eq.s32.totalorder %s18, 1
      %p50 = por %p48, %p49
      %p51 = scmp.ne.s32.totalorder %s40, %s41
      %p52 = scmp.eq.s32.totalorder %s18, 0
      %p53 = por %p51, %p52
      %p54 = scmp.ne.s32.totalorder %s40, %s41
      %p55 = scmp.eq.s32.totalorder %s19, 1
      %p56 = por %p54, %p55
      %p58 = scmp.ne.s32.totalorder %s41, %s57
      %p59 = scmp.eq.s32.totalorder %s19, 0
      %p60 = por %p58, %p59
      %s61 = ssub.s32 %s21, %s28
      %p62 = scmp.eq.s32.totalorder %s61, 0
      %s64 = sadd.s32 %s63, 1
      %s65 = scalar_select %p62, %s63, %s64
      %p68 = pneg %p62
      %p69 = scmp.eq.s32.totalorder %s13, 1
      %p70 = por %p68, %p69
      %p71 = scmp.ne.s32.totalorder %s63, %s66
      %p72 = scmp.eq.s32.totalorder %s13, 0
      %p73 = por %p71, %p72
      %p74 = scmp.ne.s32.totalorder %s63, %s66
      %p75 = scmp.eq.s32.totalorder %s18, 1
      %p76 = por %p74, %p75
      %p77 = scmp.ne.s32.totalorder %s66, %s67
      %p78 = scmp.eq.s32.totalorder %s18, 0
      %p79 = por %p77, %p78
      %p80 = scmp.ne.s32.totalorder %s66, %s67
      %p81 = scmp.eq.s32.totalorder %s19, 1
      %p82 = por %p80, %p81
      %p84 = scmp.ne.s32.totalorder %s67, %s83
      %p85 = scmp.eq.s32.totalorder %s19, 0
      %p86 = por %p84, %p85
      %s88 = sadd.s32 %s87, 1
      %p91 = scmp.eq.s32.totalorder %s13, 1
      %p92 = scmp.ne.s32.totalorder %s87, %s89
      %p93 = scmp.eq.s32.totalorder %s13, 0
      %p94 = por %p92, %p93
      %p95 = scmp.ne.s32.totalorder %s87, %s89
      %p96 = scmp.eq.s32.totalorder %s18, 1
      %p97 = por %p95, %p96
      %p98 = scmp.ne.s32.totalorder %s89, %s90
      %p99 = scmp.eq.s32.totalorder %s18, 0
      %p100 = por %p98, %p99
      %p101 = scmp.ne.s32.totalorder %s89, %s90
      %p102 = scmp.eq.s32.totalorder %s19, 1
      %p103 = por %p101, %p102
      %p105 = scmp.ne.s32.totalorder %s90, %s104
      %p106 = scmp.eq.s32.totalorder %s19, 0
      %p107 = por %p105, %p106
      %s109 = sadd.s32 %s108, 1
      %p112 = scmp.eq.s32.totalorder %s13, 1
      %p113 = scmp.ne.s32.totalorder %s108, %s110
      %p114 = scmp.eq.s32.totalorder %s13, 0
      %p115 = por %p113, %p114
      %p116 = scmp.ne.s32.totalorder %s108, %s110
      %p117 = scmp.eq.s32.totalorder %s18, 1
      %p118 = por %p116, %p117
      %p119 = scmp.ne.s32.totalorder %s110, %s111
      %p120 = scmp.eq.s32.totalorder %s18, 0
      %p121 = por %p119, %p120
      %p122 = scmp.ne.s32.totalorder %s110, %s111
      %p123 = scmp.eq.s32.totalorder %s19, 1
      %p124 = por %p122, %p123
      %p126 = scmp.ne.s32.totalorder %s111, %s125
      %p127 = scmp.eq.s32.totalorder %s19, 0
      %p128 = por %p126, %p127
      %s130 = sadd.s32 %s129, 1
      %p133 = scmp.eq.s32.totalorder %s13, 1
      %p134 = scmp.ne.s32.totalorder %s129, %s131
      %p135 = scmp.eq.s32.totalorder %s13, 0
      %p136 = por %p134, %p135
      %p137 = scmp.ne.s32.totalorder %s129, %s131
      %p138 = scmp.eq.s32.totalorder %s18, 1
      %p139 = por %p137, %p138
      %p140 = scmp.ne.s32.totalorder %s131, %s132
      %p141 = scmp.eq.s32.totalorder %s18, 0
      %p142 = por %p140, %p141
      %p143 = scmp.ne.s32.totalorder %s131, %s132
      %p144 = scmp.eq.s32.totalorder %s19, 1
      %p145 = por %p143, %p144
      %p147 = scmp.ne.s32.totalorder %s132, %s146
      %p148 = scmp.eq.s32.totalorder %s19, 0
      %p149 = por %p147, %p148
      %s151 = sadd.s32 %s150, 1
      %p154 = scmp.eq.s32.totalorder %s13, 1
      %p155 = scmp.ne.s32.totalorder %s150, %s152
      %p156 = scmp.eq.s32.totalorder %s13, 0
      %p157 = por %p155, %p156
      %p158 = scmp.ne.s32.totalorder %s150, %s152
      %p159 = scmp.eq.s32.totalorder %s18, 1
      %p160 = por %p158, %p159
      %p161 = scmp.ne.s32.totalorder %s152, %s153
      %p162 = scmp.eq.s32.totalorder %s18, 0
      %p163 = por %p161, %p162
      %p164 = scmp.ne.s32.totalorder %s152, %s153
      %p165 = scmp.eq.s32.totalorder %s19, 1
      %p166 = por %p164, %p165
      %p168 = scmp.ne.s32.totalorder %s153, %s167
      %p169 = scmp.eq.s32.totalorder %s19, 0
      %p170 = por %p168, %p169
      %s172 = sadd.s32 %s171, 1
      %p175 = scmp.eq.s32.totalorder %s13, 1
      %p176 = scmp.ne.s32.totalorder %s171, %s173
      %p177 = scmp.eq.s32.totalorder %s13, 0
      %p178 = por %p176, %p177
      %p179 = scmp.ne.s32.totalorder %s171, %s173
      %p180 = scmp.eq.s32.totalorder %s18, 1
      %p181 = por %p179, %p180
      %p182 = scmp.ne.s32.totalorder %s173, %s174
      %p183 = scmp.eq.s32.totalorder %s18, 0
      %p184 = por %p182, %p183
      %p185 = scmp.ne.s32.totalorder %s173, %s174
      %p186 = scmp.eq.s32.totalorder %s19, 1
      %p187 = por %p185, %p186
      %p189 = scmp.ne.s32.totalorder %s174, %s188
      %p190 = scmp.eq.s32.totalorder %s19, 0
      %p191 = por %p189, %p190
      %s192 = ssub.s32 %s20, %s32
      %p193 = scmp.eq.s32.totalorder %s192, 0
      %s195 = sadd.s32 %s194, 1
      %s196 = scalar_select %p193, %s194, %s195
      %p199 = pneg %p193
      %p200 = scmp.eq.s32.totalorder %s13, 1
      %p201 = por %p199, %p200
      %p202 = scmp.ne.s32.totalorder %s194, %s197
      %p203 = scmp.eq.s32.totalorder %s13, 0
      %p204 = por %p202, %p203
      %p205 = scmp.ne.s32.totalorder %s194, %s197
      %p206 = scmp.eq.s32.totalorder %s18, 1
      %p207 = por %p205, %p206
      %p208 = scmp.ne.s32.totalorder %s197, %s198
      %p209 = scmp.eq.s32.totalorder %s18, 0
      %p210 = por %p208, %p209
      %p211 = scmp.ne.s32.totalorder %s197, %s198
      %p212 = scmp.eq.s32.totalorder %s19, 1
      %p213 = por %p211, %p212
      %p215 = scmp.ne.s32.totalorder %s198, %s214
      %p216 = scmp.eq.s32.totalorder %s19, 0
      %p217 = por %p215, %p216
      %p218 = scmp.le.s32.totalorder 1, %s13
      %p219 = scmp.lt.s32.totalorder %s13, 3
      %p220 = pnand %p218, %p219
      %p221 = pneg %p220
      // Predicated region
      $region9: #{mydnnnet_forward.1} parent=5 // pred_check
        _
      $region10: #{mydnnnet_forward.1} parent=5 // pred_check_branch
        %223 = sbr.rel (%p220) target = $region12
      $region11: #{mydnnnet_forward.1} parent=5 // pred_region
        %s224 = ssub.s32 %s13, 1
        // Predicated region
        $region13: #{mydnnnet_forward.1} parent=11 // pred_check
          %p225 = pneg %p100
        $region14: #{mydnnnet_forward.1} parent=11 // pred_check_branch
          %227 = sbr.rel (%p225) target = $region16
        $region15: #{mydnnnet_forward.1} parent=11 // pred_region
          _
        $region16: #{mydnnnet_forward.1} parent=11 // pred_fallthru
          _
        // Predicated region
        $region17: #{mydnnnet_forward.1} parent=11 // pred_check
          %p228 = pneg %p121
        $region18: #{mydnnnet_forward.1} parent=11 // pred_check_branch
          %230 = sbr.rel (%p228) target = $region20
        $region19: #{mydnnnet_forward.1} parent=11 // pred_region
          _
        $region20: #{mydnnnet_forward.1} parent=11 // pred_fallthru
          _
        // Predicated region
        $region21: #{mydnnnet_forward.1} parent=11 // pred_check
          %p231 = pneg %p142
        $region22: #{mydnnnet_forward.1} parent=11 // pred_check_branch
          %233 = sbr.rel (%p231) target = $region24
        $region23: #{mydnnnet_forward.1} parent=11 // pred_region
          _
        $region24: #{mydnnnet_forward.1} parent=11 // pred_fallthru
          _
        // Predicated region
        $region25: #{mydnnnet_forward.1} parent=11 // pred_check
          %p234 = pneg %p163
        $region26: #{mydnnnet_forward.1} parent=11 // pred_check_branch
          %236 = sbr.rel (%p234) target = $region28
        $region27: #{mydnnnet_forward.1} parent=11 // pred_region
          _
        $region28: #{mydnnnet_forward.1} parent=11 // pred_fallthru
          _
        // Predicated region
        $region29: #{mydnnnet_forward.1} parent=11 // pred_check
          %p237 = pneg %p184
        $region30: #{mydnnnet_forward.1} parent=11 // pred_check_branch
          %239 = sbr.rel (%p237) target = $region32
        $region31: #{mydnnnet_forward.1} parent=11 // pred_region
          _
        $region32: #{mydnnnet_forward.1} parent=11 // pred_fallthru
          _
      $region12: #{mydnnnet_forward.1} parent=5 // pred_fallthru
        _
      %p240 = scmp.lt.s32.totalorder %s13, 2
      // Predicated region
      $region33: #{mydnnnet_forward.1} parent=5 // pred_check
        %p241 = pneg %p240
      $region34: #{mydnnnet_forward.1} parent=5 // pred_check_branch
        %243 = sbr.rel (%p241) target = $region36
      $region35: #{mydnnnet_forward.1} parent=5 // pred_region
        // Predicated region
        $region37: #{mydnnnet_forward.1} parent=35 // pred_check
          %p244 = pneg %p47
        $region38: #{mydnnnet_forward.1} parent=35 // pred_check_branch
          %246 = sbr.rel (%p244) target = $region40
        $region39: #{mydnnnet_forward.1} parent=35 // pred_region
          %s247 = sand.u32 %s37, 1
          %s248 = sand.u32 %s37, 1
          %s249 = smul.addr %s248, 32
          %s250 = scalar_lea.vmem [#allocation3], %s249
          %s251 = smul.u32 2, %s20
          %s252 = smul.u32 4, %s21
          %s253 = smul.addr %s251, 8
          %s254 = sadd.s32 %s252, %s253
          %s255 = smul.addr %s254, 4
          %s256 = scalar_lea.vmem %s0, %s255
          // Predicated region
          $region41: #{mydnnnet_forward.1} parent=39 // pred_check
            _
          $region42: #{mydnnnet_forward.1} parent=39 // pred_check_branch
            %258 = sbr.rel (0) target = $region44
          $region43: #{mydnnnet_forward.1} parent=39 // pred_region
            // Predicated region
            $region45: #{mydnnnet_forward.1} parent=43 // pred_check
              _
            $region46: #{mydnnnet_forward.1} parent=43 // pred_check_branch
              %260 = sbr.rel (0) target = $region48
            $region47: #{mydnnnet_forward.1} parent=43 // pred_region
              loop: start=0, step=1, limit=1
              $region49: #{mydnnnet_forward.1} parent=47 // loop_pre_header
                _
              $region50: #{mydnnnet_forward.1} parent=47 // loop_header
                %s262 = sphi 0, %s266
                %p263 = scmp.ge.s32.totalorder %s262, 1
                %s267 = sphi %s256, %s256
                %s268 = sphi %s250, %s250
              $region51: #{mydnnnet_forward.1} parent=47 // loop_header_branch
                %265 = sbr.rel (%p263) target = $region55
              $region52: #{mydnnnet_forward.1} parent=47 // loop_body
                %v269 = vld [vmem:[%s267] sm:$0xff]
                %270 = vst [vmem:[%s268] sm:$0xff] %v269
                %v271 = vld [vmem:[%s267 + $0x8] sm:$0xff]
                %272 = vst [vmem:[%s268 + $0x8] sm:$0xff] %v271
                %v273 = vld [vmem:[%s267 + $0x20] sm:$0xff]
                %274 = vst [vmem:[%s268 + $0x10] sm:$0xff] %v273
                %v275 = vld [vmem:[%s267 + $0x28] sm:$0xff]
                %276 = vst [vmem:[%s268 + $0x18] sm:$0xff] %v275
              $region53: #{mydnnnet_forward.1} parent=47 // loop_footer
                %s266 = sadd.s32 1, %s262
              $region54: #{mydnnnet_forward.1} parent=47 // loop_footer_branch
                %261 = sbr.rel target = $region50
              $region55: #{mydnnnet_forward.1} parent=47 // loop_exit
                _
            $region48: #{mydnnnet_forward.1} parent=43 // pred_fallthru
              _
            // Predicated region
            $region56: #{mydnnnet_forward.1} parent=43 // pred_check
              _
            $region57: #{mydnnnet_forward.1} parent=43 // pred_check_branch
              %278 = sbr.rel target = $region59
            $region58: #{mydnnnet_forward.1} parent=43 // pred_region
              _
            $region59: #{mydnnnet_forward.1} parent=43 // pred_fallthru
              _
          $region44: #{mydnnnet_forward.1} parent=39 // pred_fallthru
            _
          %279 = vnop
        $region40: #{mydnnnet_forward.1} parent=35 // pred_fallthru
          _
        // Predicated region
        $region60: #{mydnnnet_forward.1} parent=35 // pred_check
          %p280 = pneg %p73
        $region61: #{mydnnnet_forward.1} parent=35 // pred_check_branch
          %282 = sbr.rel (%p280) target = $region63
        $region62: #{mydnnnet_forward.1} parent=35 // pred_region
          %s283 = smul.u32 64, %s21
          %p284 = scmp.lt.s32.totalorder %s283, 127
          %s285 = scalar_select %p284, %s283, 127
          %s286 = smul.addr %s285, 8
          %s287 = smul.addr %s286, 4
          %s288 = scalar_lea.vmem %s1, %s287
          %s289 = smul.u32 64, %s21
        $region63: #{mydnnnet_forward.1} parent=35 // pred_fallthru
          _
      $region36: #{mydnnnet_forward.1} parent=5 // pred_fallthru
        _
      %p290 = scmp.le.s32.totalorder 1, %s13
      %p291 = scmp.lt.s32.totalorder %s13, 3
      %p292 = pnand %p290, %p291
      %p293 = pneg %p292
      // Predicated region
      $region64: #{mydnnnet_forward.1} parent=5 // pred_check
        _
      $region65: #{mydnnnet_forward.1} parent=5 // pred_check_branch
        %295 = sbr.rel (%p292) target = $region67
      $region66: #{mydnnnet_forward.1} parent=5 // pred_region
        %s296 = ssub.s32 %s13, 1
        %s297 = sand.u32 %s40, 1
        %s298 = sand.u32 %s40, 1
        %s299 = smul.addr %s298, 32
        %s300 = scalar_lea.vmem [#allocation3], %s299
        // Predicated region
        $region68: #{mydnnnet_forward.1} parent=66 // pred_check
          %p301 = pneg %p53
        $region69: #{mydnnnet_forward.1} parent=66 // pred_check_branch
          %303 = sbr.rel (%p301) target = $region71
        $region70: #{mydnnnet_forward.1} parent=66 // pred_region
          _
        $region71: #{mydnnnet_forward.1} parent=66 // pred_fallthru
          _
        %s304 = sand.u32 %s40, 1
        %s305 = sand.u32 %s40, 1
        %s306 = smul.addr %s305, 32
        %s307 = scalar_lea.vmem [#allocation3], %s306
        %p308 = pneg %p53
        %p309 = pneg %p50
        %s310 = smul.u32 64, %s23
        %p311 = scmp.lt.s32.totalorder %s310, 127
        %s312 = scalar_select %p311, %s310, 127
        %s313 = smul.addr %s312, 8
        %s314 = smul.addr %s313, 4
        %s315 = scalar_lea.vmem %s1, %s314
        %p316 = pneg %p79
        %p317 = pneg %p76
        %p318 = pneg %p100
        %p319 = pneg %p97
        %p320 = pneg %p121
        %p321 = pneg %p118
        %p322 = pneg %p142
        %p323 = pneg %p139
        %p324 = pneg %p163
        %p325 = pneg %p160
        %p326 = pneg %p184
        %p327 = pneg %p181
        %p328 = pneg %p210
        %p329 = pneg %p207
        %s330 = smul.u32 2, %s22
        %p331 = scmp.lt.s32.totalorder %s330, 1
        %s332 = scalar_select %p331, %s330, 1
        %s333 = smul.addr %s332, 8
        %s334 = scalar_lea.vmem %s7, %s333
        %s335 = smul.u32 2, %s22
        %s336 = smul.u32 4, %s23
        %s337 = smul.u32 64, %s23
        %p338 = scmp.lt.s32.totalorder %s337, 127
        %s339 = scalar_select %p338, %s337, 127
        %s340 = smul.addr %s339, 8
        %s341 = smul.addr %s340, 4
        %s342 = scalar_lea.vmem %s1, %s341
        %s343 = smul.u32 64, %s23
        %s344 = smul.u32 2, %s22
        %p345 = scmp.lt.s32.totalorder %s344, 1
        %s346 = scalar_select %p345, %s344, 1
        %s347 = smul.addr %s346, 8
        %s348 = scalar_lea.vmem %s7, %s347
        %s349 = smul.u32 2, %s22
        %p351 = scmp.eq.s32.totalorder %s23, 0
        // Predicated region
        $region72: #{mydnnnet_forward.1} parent=66 // pred_check
          %p352 = pneg %p351
        $region73: #{mydnnnet_forward.1} parent=66 // pred_check_branch
          %354 = sbr.rel (%p352) target = $region75
        $region74: #{mydnnnet_forward.1} parent=66 // pred_region
          %355 = vst [vmem:[#allocation2] sm:$0xff] 0.0
          %356 = vst [vmem:[#allocation2 + $0x8] sm:$0xff] 0.0
          %357 = vst [vmem:[#allocation2 + $0x10] sm:$0xff] 0.0
          %358 = vst [vmem:[#allocation2 + $0x18] sm:$0xff] 0.0
          %359 = vst [vmem:[#allocation2 + $0x20] sm:$0xff] 0.0
          %360 = vst [vmem:[#allocation2 + $0x28] sm:$0xff] 0.0
          %361 = vst [vmem:[#allocation2 + $0x30] sm:$0xff] 0.0
          %362 = vst [vmem:[#allocation2 + $0x38] sm:$0xff] 0.0
          %363 = vst [vmem:[#allocation2 + $0x40] sm:$0xff] 0.0
          %364 = vst [vmem:[#allocation2 + $0x48] sm:$0xff] 0.0
          %365 = vst [vmem:[#allocation2 + $0x50] sm:$0xff] 0.0
          %366 = vst [vmem:[#allocation2 + $0x58] sm:$0xff] 0.0
          %367 = vst [vmem:[#allocation2 + $0x60] sm:$0xff] 0.0
          %368 = vst [vmem:[#allocation2 + $0x68] sm:$0xff] 0.0
          %369 = vst [vmem:[#allocation2 + $0x70] sm:$0xff] 0.0
          %370 = vst [vmem:[#allocation2 + $0x78] sm:$0xff] 0.0
        $region75: #{mydnnnet_forward.1} parent=66 // pred_fallthru
          _
        %v371 = vld [vmem:[#allocation2] sm:$0xff]
        %v372 = vld [vmem:[#allocation2 + $0x8] sm:$0xff]
        %v373 = vld [vmem:[#allocation2 + $0x10] sm:$0xff]
        %v374 = vld [vmem:[#allocation2 + $0x18] sm:$0xff]
        %v375 = vld [vmem:[#allocation2 + $0x20] sm:$0xff]
        %v376 = vld [vmem:[#allocation2 + $0x28] sm:$0xff]
        %v377 = vld [vmem:[#allocation2 + $0x30] sm:$0xff]
        %v378 = vld [vmem:[#allocation2 + $0x38] sm:$0xff]
        %v379 = vld [vmem:[#allocation2 + $0x40] sm:$0xff]
        %v380 = vld [vmem:[#allocation2 + $0x48] sm:$0xff]
        %v381 = vld [vmem:[#allocation2 + $0x50] sm:$0xff]
        %v382 = vld [vmem:[#allocation2 + $0x58] sm:$0xff]
        %v383 = vld [vmem:[#allocation2 + $0x60] sm:$0xff]
        %v384 = vld [vmem:[#allocation2 + $0x68] sm:$0xff]
        %v385 = vld [vmem:[#allocation2 + $0x70] sm:$0xff]
        %v386 = vld [vmem:[#allocation2 + $0x78] sm:$0xff]
        %v387 = vld [vmem:[%s300] sm:$0xff]
        %v388 = vld [vmem:[%s300 + $0x8] sm:$0xff]
        %v389 = vld [vmem:[%s300 + $0x10] sm:$0xff]
        %v390 = vld [vmem:[%s300 + $0x18] sm:$0xff]
        %v391 = vld [vmem:[%s342] sm:$0xff]
        %v392 = vld [vmem:[%s342 + $0x8] sm:$0xff]
        %v393 = vld [vmem:[%s342 + $0x10] sm:$0xff]
        %v394 = vld [vmem:[%s342 + $0x18] sm:$0xff]
        %v395 = vld [vmem:[%s342 + $0x20] sm:$0xff]
        %v396 = vld [vmem:[%s342 + $0x28] sm:$0xff]
        %v397 = vld [vmem:[%s342 + $0x30] sm:$0xff]
        %v398 = vld [vmem:[%s342 + $0x38] sm:$0xff]
        %v399 = vld [vmem:[%s342 + $0x40] sm:$0xff]
        %v400 = vld [vmem:[%s342 + $0x48] sm:$0xff]
        %v401 = vld [vmem:[%s342 + $0x50] sm:$0xff]
        %v402 = vld [vmem:[%s342 + $0x58] sm:$0xff]
        %v403 = vld [vmem:[%s342 + $0x60] sm:$0xff]
        %v404 = vld [vmem:[%s342 + $0x68] sm:$0xff]
        %v405 = vld [vmem:[%s342 + $0x70] sm:$0xff]
        %v406 = vld [vmem:[%s342 + $0x78] sm:$0xff]
        %v407 = vld [vmem:[%s342 + $0x80] sm:$0xff]
        %v408 = vld [vmem:[%s342 + $0x88] sm:$0xff]
        %v409 = vld [vmem:[%s342 + $0x90] sm:$0xff]
        %v410 = vld [vmem:[%s342 + $0x98] sm:$0xff]
        %v411 = vld [vmem:[%s342 + $0xa0] sm:$0xff]
        %v412 = vld [vmem:[%s342 + $0xa8] sm:$0xff]
        %v413 = vld [vmem:[%s342 + $0xb0] sm:$0xff]
        %v414 = vld [vmem:[%s342 + $0xb8] sm:$0xff]
        %v415 = vld [vmem:[%s342 + $0xc0] sm:$0xff]
        %v416 = vld [vmem:[%s342 + $0xc8] sm:$0xff]
        %v417 = vld [vmem:[%s342 + $0xd0] sm:$0xff]
        %v418 = vld [vmem:[%s342 + $0xd8] sm:$0xff]
        %v419 = vld [vmem:[%s342 + $0xe0] sm:$0xff]
        %v420 = vld [vmem:[%s342 + $0xe8] sm:$0xff]
        %v421 = vld [vmem:[%s342 + $0xf0] sm:$0xff]
        %v422 = vld [vmem:[%s342 + $0xf8] sm:$0xff]
        %v423 = vld [vmem:[%s342 + $0x100] sm:$0xff]
        %v424 = vld [vmem:[%s342 + $0x108] sm:$0xff]
        %v425 = vld [vmem:[%s342 + $0x110] sm:$0xff]
        %v426 = vld [vmem:[%s342 + $0x118] sm:$0xff]
        %v427 = vld [vmem:[%s342 + $0x120] sm:$0xff]
        %v428 = vld [vmem:[%s342 + $0x128] sm:$0xff]
        %v429 = vld [vmem:[%s342 + $0x130] sm:$0xff]
        %v430 = vld [vmem:[%s342 + $0x138] sm:$0xff]
        %v431 = vld [vmem:[%s342 + $0x140] sm:$0xff]
        %v432 = vld [vmem:[%s342 + $0x148] sm:$0xff]
        %v433 = vld [vmem:[%s342 + $0x150] sm:$0xff]
        %v434 = vld [vmem:[%s342 + $0x158] sm:$0xff]
        %v435 = vld [vmem:[%s342 + $0x160] sm:$0xff]
        %v436 = vld [vmem:[%s342 + $0x168] sm:$0xff]
        %v437 = vld [vmem:[%s342 + $0x170] sm:$0xff]
        %v438 = vld [vmem:[%s342 + $0x178] sm:$0xff]
        %v439 = vld [vmem:[%s342 + $0x180] sm:$0xff]
        %v440 = vld [vmem:[%s342 + $0x188] sm:$0xff]
        %v441 = vld [vmem:[%s342 + $0x190] sm:$0xff]
        %v442 = vld [vmem:[%s342 + $0x198] sm:$0xff]
        %v443 = vld [vmem:[%s342 + $0x1a0] sm:$0xff]
        %v444 = vld [vmem:[%s342 + $0x1a8] sm:$0xff]
        %v445 = vld [vmem:[%s342 + $0x1b0] sm:$0xff]
        %v446 = vld [vmem:[%s342 + $0x1b8] sm:$0xff]
        %v447 = vld [vmem:[%s342 + $0x1c0] sm:$0xff]
        %v448 = vld [vmem:[%s342 + $0x1c8] sm:$0xff]
        %v449 = vld [vmem:[%s342 + $0x1d0] sm:$0xff]
        %v450 = vld [vmem:[%s342 + $0x1d8] sm:$0xff]
        %v451 = vld [vmem:[%s342 + $0x1e0] sm:$0xff]
        %v452 = vld [vmem:[%s342 + $0x1e8] sm:$0xff]
        %v453 = vld [vmem:[%s342 + $0x1f0] sm:$0xff]
        %v454 = vld [vmem:[%s342 + $0x1f8] sm:$0xff]
        %v455 = vld [vmem:[%s342 + $0x200] sm:$0xff]
        %v456 = vld [vmem:[%s342 + $0x208] sm:$0xff]
        %v457 = vld [vmem:[%s342 + $0x210] sm:$0xff]
        %v458 = vld [vmem:[%s342 + $0x218] sm:$0xff]
        %v459 = vld [vmem:[%s342 + $0x220] sm:$0xff]
        %v460 = vld [vmem:[%s342 + $0x228] sm:$0xff]
        %v461 = vld [vmem:[%s342 + $0x230] sm:$0xff]
        %v462 = vld [vmem:[%s342 + $0x238] sm:$0xff]
        %v463 = vld [vmem:[%s342 + $0x240] sm:$0xff]
        %v464 = vld [vmem:[%s342 + $0x248] sm:$0xff]
        %v465 = vld [vmem:[%s342 + $0x250] sm:$0xff]
        %v466 = vld [vmem:[%s342 + $0x258] sm:$0xff]
        %v467 = vld [vmem:[%s342 + $0x260] sm:$0xff]
        %v468 = vld [vmem:[%s342 + $0x268] sm:$0xff]
        %v469 = vld [vmem:[%s342 + $0x270] sm:$0xff]
        %v470 = vld [vmem:[%s342 + $0x278] sm:$0xff]
        %v471 = vld [vmem:[%s342 + $0x280] sm:$0xff]
        %v472 = vld [vmem:[%s342 + $0x288] sm:$0xff]
        %v473 = vld [vmem:[%s342 + $0x290] sm:$0xff]
        %v474 = vld [vmem:[%s342 + $0x298] sm:$0xff]
        %v475 = vld [vmem:[%s342 + $0x2a0] sm:$0xff]
        %v476 = vld [vmem:[%s342 + $0x2a8] sm:$0xff]
        %v477 = vld [vmem:[%s342 + $0x2b0] sm:$0xff]
        %v478 = vld [vmem:[%s342 + $0x2b8] sm:$0xff]
        %v479 = vld [vmem:[%s342 + $0x2c0] sm:$0xff]
        %v480 = vld [vmem:[%s342 + $0x2c8] sm:$0xff]
        %v481 = vld [vmem:[%s342 + $0x2d0] sm:$0xff]
        %v482 = vld [vmem:[%s342 + $0x2d8] sm:$0xff]
        %v483 = vld [vmem:[%s342 + $0x2e0] sm:$0xff]
        %v484 = vld [vmem:[%s342 + $0x2e8] sm:$0xff]
        %v485 = vld [vmem:[%s342 + $0x2f0] sm:$0xff]
        %v486 = vld [vmem:[%s342 + $0x2f8] sm:$0xff]
        %v487 = vld [vmem:[%s342 + $0x300] sm:$0xff]
        %v488 = vld [vmem:[%s342 + $0x308] sm:$0xff]
        %v489 = vld [vmem:[%s342 + $0x310] sm:$0xff]
        %v490 = vld [vmem:[%s342 + $0x318] sm:$0xff]
        %v491 = vld [vmem:[%s342 + $0x320] sm:$0xff]
        %v492 = vld [vmem:[%s342 + $0x328] sm:$0xff]
        %v493 = vld [vmem:[%s342 + $0x330] sm:$0xff]
        %v494 = vld [vmem:[%s342 + $0x338] sm:$0xff]
        %v495 = vld [vmem:[%s342 + $0x340] sm:$0xff]
        %v496 = vld [vmem:[%s342 + $0x348] sm:$0xff]
        %v497 = vld [vmem:[%s342 + $0x350] sm:$0xff]
        %v498 = vld [vmem:[%s342 + $0x358] sm:$0xff]
        %v499 = vld [vmem:[%s342 + $0x360] sm:$0xff]
        %v500 = vld [vmem:[%s342 + $0x368] sm:$0xff]
        %v501 = vld [vmem:[%s342 + $0x370] sm:$0xff]
        %v502 = vld [vmem:[%s342 + $0x378] sm:$0xff]
        %v503 = vld [vmem:[%s342 + $0x380] sm:$0xff]
        %v504 = vld [vmem:[%s342 + $0x388] sm:$0xff]
        %v505 = vld [vmem:[%s342 + $0x390] sm:$0xff]
        %v506 = vld [vmem:[%s342 + $0x398] sm:$0xff]
        %v507 = vld [vmem:[%s342 + $0x3a0] sm:$0xff]
        %v508 = vld [vmem:[%s342 + $0x3a8] sm:$0xff]
        %v509 = vld [vmem:[%s342 + $0x3b0] sm:$0xff]
        %v510 = vld [vmem:[%s342 + $0x3b8] sm:$0xff]
        %v511 = vld [vmem:[%s342 + $0x3c0] sm:$0xff]
        %v512 = vld [vmem:[%s342 + $0x3c8] sm:$0xff]
        %v513 = vld [vmem:[%s342 + $0x3d0] sm:$0xff]
        %v514 = vld [vmem:[%s342 + $0x3d8] sm:$0xff]
        %v515 = vld [vmem:[%s342 + $0x3e0] sm:$0xff]
        %v516 = vld [vmem:[%s342 + $0x3e8] sm:$0xff]
        %v517 = vld [vmem:[%s342 + $0x3f0] sm:$0xff]
        %v518 = vld [vmem:[%s342 + $0x3f8] sm:$0xff]
        %v519 = vld [vmem:[%s342 + $0x400] sm:$0xff]
        %v520 = vld [vmem:[%s342 + $0x408] sm:$0xff]
        %v521 = vld [vmem:[%s342 + $0x410] sm:$0xff]
        %v522 = vld [vmem:[%s342 + $0x418] sm:$0xff]
        %v523 = vld [vmem:[%s342 + $0x420] sm:$0xff]
        %v524 = vld [vmem:[%s342 + $0x428] sm:$0xff]
        %v525 = vld [vmem:[%s342 + $0x430] sm:$0xff]
        %v526 = vld [vmem:[%s342 + $0x438] sm:$0xff]
        %v527 = vld [vmem:[%s342 + $0x440] sm:$0xff]
        %v528 = vld [vmem:[%s342 + $0x448] sm:$0xff]
        %v529 = vld [vmem:[%s342 + $0x450] sm:$0xff]
        %v530 = vld [vmem:[%s342 + $0x458] sm:$0xff]
        %v531 = vld [vmem:[%s342 + $0x460] sm:$0xff]
        %v532 = vld [vmem:[%s342 + $0x468] sm:$0xff]
        %v533 = vld [vmem:[%s342 + $0x470] sm:$0xff]
        %v534 = vld [vmem:[%s342 + $0x478] sm:$0xff]
        %v535 = vld [vmem:[%s342 + $0x480] sm:$0xff]
        %v536 = vld [vmem:[%s342 + $0x488] sm:$0xff]
        %v537 = vld [vmem:[%s342 + $0x490] sm:$0xff]
        %v538 = vld [vmem:[%s342 + $0x498] sm:$0xff]
        %v539 = vld [vmem:[%s342 + $0x4a0] sm:$0xff]
        %v540 = vld [vmem:[%s342 + $0x4a8] sm:$0xff]
        %v541 = vld [vmem:[%s342 + $0x4b0] sm:$0xff]
        %v542 = vld [vmem:[%s342 + $0x4b8] sm:$0xff]
        %v543 = vld [vmem:[%s342 + $0x4c0] sm:$0xff]
        %v544 = vld [vmem:[%s342 + $0x4c8] sm:$0xff]
        %v545 = vld [vmem:[%s342 + $0x4d0] sm:$0xff]
        %v546 = vld [vmem:[%s342 + $0x4d8] sm:$0xff]
        %v547 = vld [vmem:[%s342 + $0x4e0] sm:$0xff]
        %v548 = vld [vmem:[%s342 + $0x4e8] sm:$0xff]
        %v549 = vld [vmem:[%s342 + $0x4f0] sm:$0xff]
        %v550 = vld [vmem:[%s342 + $0x4f8] sm:$0xff]
        %v551 = vld [vmem:[%s342 + $0x500] sm:$0xff]
        %v552 = vld [vmem:[%s342 + $0x508] sm:$0xff]
        %v553 = vld [vmem:[%s342 + $0x510] sm:$0xff]
        %v554 = vld [vmem:[%s342 + $0x518] sm:$0xff]
        %v555 = vld [vmem:[%s342 + $0x520] sm:$0xff]
        %v556 = vld [vmem:[%s342 + $0x528] sm:$0xff]
        %v557 = vld [vmem:[%s342 + $0x530] sm:$0xff]
        %v558 = vld [vmem:[%s342 + $0x538] sm:$0xff]
        %v559 = vld [vmem:[%s342 + $0x540] sm:$0xff]
        %v560 = vld [vmem:[%s342 + $0x548] sm:$0xff]
        %v561 = vld [vmem:[%s342 + $0x550] sm:$0xff]
        %v562 = vld [vmem:[%s342 + $0x558] sm:$0xff]
        %v563 = vld [vmem:[%s342 + $0x560] sm:$0xff]
        %v564 = vld [vmem:[%s342 + $0x568] sm:$0xff]
        %v565 = vld [vmem:[%s342 + $0x570] sm:$0xff]
        %v566 = vld [vmem:[%s342 + $0x578] sm:$0xff]
        %v567 = vld [vmem:[%s342 + $0x580] sm:$0xff]
        %v568 = vld [vmem:[%s342 + $0x588] sm:$0xff]
        %v569 = vld [vmem:[%s342 + $0x590] sm:$0xff]
        %v570 = vld [vmem:[%s342 + $0x598] sm:$0xff]
        %v571 = vld [vmem:[%s342 + $0x5a0] sm:$0xff]
        %v572 = vld [vmem:[%s342 + $0x5a8] sm:$0xff]
        %v573 = vld [vmem:[%s342 + $0x5b0] sm:$0xff]
        %v574 = vld [vmem:[%s342 + $0x5b8] sm:$0xff]
        %v575 = vld [vmem:[%s342 + $0x5c0] sm:$0xff]
        %v576 = vld [vmem:[%s342 + $0x5c8] sm:$0xff]
        %v577 = vld [vmem:[%s342 + $0x5d0] sm:$0xff]
        %v578 = vld [vmem:[%s342 + $0x5d8] sm:$0xff]
        %v579 = vld [vmem:[%s342 + $0x5e0] sm:$0xff]
        %v580 = vld [vmem:[%s342 + $0x5e8] sm:$0xff]
        %v581 = vld [vmem:[%s342 + $0x5f0] sm:$0xff]
        %v582 = vld [vmem:[%s342 + $0x5f8] sm:$0xff]
        %v583 = vld [vmem:[%s342 + $0x600] sm:$0xff]
        %v584 = vld [vmem:[%s342 + $0x608] sm:$0xff]
        %v585 = vld [vmem:[%s342 + $0x610] sm:$0xff]
        %v586 = vld [vmem:[%s342 + $0x618] sm:$0xff]
        %v587 = vld [vmem:[%s342 + $0x620] sm:$0xff]
        %v588 = vld [vmem:[%s342 + $0x628] sm:$0xff]
        %v589 = vld [vmem:[%s342 + $0x630] sm:$0xff]
        %v590 = vld [vmem:[%s342 + $0x638] sm:$0xff]
        %v591 = vld [vmem:[%s342 + $0x640] sm:$0xff]
        %v592 = vld [vmem:[%s342 + $0x648] sm:$0xff]
        %v593 = vld [vmem:[%s342 + $0x650] sm:$0xff]
        %v594 = vld [vmem:[%s342 + $0x658] sm:$0xff]
        %v595 = vld [vmem:[%s342 + $0x660] sm:$0xff]
        %v596 = vld [vmem:[%s342 + $0x668] sm:$0xff]
        %v597 = vld [vmem:[%s342 + $0x670] sm:$0xff]
        %v598 = vld [vmem:[%s342 + $0x678] sm:$0xff]
        %v599 = vld [vmem:[%s342 + $0x680] sm:$0xff]
        %v600 = vld [vmem:[%s342 + $0x688] sm:$0xff]
        %v601 = vld [vmem:[%s342 + $0x690] sm:$0xff]
        %v602 = vld [vmem:[%s342 + $0x698] sm:$0xff]
        %v603 = vld [vmem:[%s342 + $0x6a0] sm:$0xff]
        %v604 = vld [vmem:[%s342 + $0x6a8] sm:$0xff]
        %v605 = vld [vmem:[%s342 + $0x6b0] sm:$0xff]
        %v606 = vld [vmem:[%s342 + $0x6b8] sm:$0xff]
        %v607 = vld [vmem:[%s342 + $0x6c0] sm:$0xff]
        %v608 = vld [vmem:[%s342 + $0x6c8] sm:$0xff]
        %v609 = vld [vmem:[%s342 + $0x6d0] sm:$0xff]
        %v610 = vld [vmem:[%s342 + $0x6d8] sm:$0xff]
        %v611 = vld [vmem:[%s342 + $0x6e0] sm:$0xff]
        %v612 = vld [vmem:[%s342 + $0x6e8] sm:$0xff]
        %v613 = vld [vmem:[%s342 + $0x6f0] sm:$0xff]
        %v614 = vld [vmem:[%s342 + $0x6f8] sm:$0xff]
        %v615 = vld [vmem:[%s342 + $0x700] sm:$0xff]
        %v616 = vld [vmem:[%s342 + $0x708] sm:$0xff]
        %v617 = vld [vmem:[%s342 + $0x710] sm:$0xff]
        %v618 = vld [vmem:[%s342 + $0x718] sm:$0xff]
        %v619 = vld [vmem:[%s342 + $0x720] sm:$0xff]
        %v620 = vld [vmem:[%s342 + $0x728] sm:$0xff]
        %v621 = vld [vmem:[%s342 + $0x730] sm:$0xff]
        %v622 = vld [vmem:[%s342 + $0x738] sm:$0xff]
        %v623 = vld [vmem:[%s342 + $0x740] sm:$0xff]
        %v624 = vld [vmem:[%s342 + $0x748] sm:$0xff]
        %v625 = vld [vmem:[%s342 + $0x750] sm:$0xff]
        %v626 = vld [vmem:[%s342 + $0x758] sm:$0xff]
        %v627 = vld [vmem:[%s342 + $0x760] sm:$0xff]
        %v628 = vld [vmem:[%s342 + $0x768] sm:$0xff]
        %v629 = vld [vmem:[%s342 + $0x770] sm:$0xff]
        %v630 = vld [vmem:[%s342 + $0x778] sm:$0xff]
        %v631 = vld [vmem:[%s342 + $0x780] sm:$0xff]
        %v632 = vld [vmem:[%s342 + $0x788] sm:$0xff]
        %v633 = vld [vmem:[%s342 + $0x790] sm:$0xff]
        %v634 = vld [vmem:[%s342 + $0x798] sm:$0xff]
        %v635 = vld [vmem:[%s342 + $0x7a0] sm:$0xff]
        %v636 = vld [vmem:[%s342 + $0x7a8] sm:$0xff]
        %v637 = vld [vmem:[%s342 + $0x7b0] sm:$0xff]
        %v638 = vld [vmem:[%s342 + $0x7b8] sm:$0xff]
        %v639 = vld [vmem:[%s342 + $0x7c0] sm:$0xff]
        %v640 = vld [vmem:[%s342 + $0x7c8] sm:$0xff]
        %v641 = vld [vmem:[%s342 + $0x7d0] sm:$0xff]
        %v642 = vld [vmem:[%s342 + $0x7d8] sm:$0xff]
        %v643 = vld [vmem:[%s342 + $0x7e0] sm:$0xff]
        %v644 = vld [vmem:[%s342 + $0x7e8] sm:$0xff]
        %v645 = vld [vmem:[%s342 + $0x7f0] sm:$0xff]
        %v646 = vld [vmem:[%s342 + $0x7f8] sm:$0xff]
        %v651 = vunpack.c.l.b16 %v387
        %v652 = vunpack.c.h.b16 %v387
        %v653 = vunpack.c.l.b16 %v388
        %v654 = vunpack.c.h.b16 %v388
        %v655 = vunpack.c.l.b16 %v389
        %v656 = vunpack.c.h.b16 %v389
        %v657 = vunpack.c.l.b16 %v390
        %v658 = vunpack.c.h.b16 %v390
        %v659 = vpack.c.b16 %v655, %v651
        %v660 = vpack.c.b16 %v656, %v652
        %v661 = vpack.c.b16 %v657, %v653
        %v662 = vpack.c.b16 %v658, %v654
        %v923 = vunpack.c.l.b16 %v391
        %v924 = vunpack.c.h.b16 %v391
        %v925 = vunpack.c.l.b16 %v392
        %v926 = vunpack.c.h.b16 %v392
        %v927 = vunpack.c.l.b16 %v393
        %v928 = vunpack.c.h.b16 %v393
        %v929 = vunpack.c.l.b16 %v394
        %v930 = vunpack.c.h.b16 %v394
        %v931 = vunpack.c.l.b16 %v395
        %v932 = vunpack.c.h.b16 %v395
        %v933 = vunpack.c.l.b16 %v396
        %v934 = vunpack.c.h.b16 %v396
        %v935 = vunpack.c.l.b16 %v397
        %v936 = vunpack.c.h.b16 %v397
        %v937 = vunpack.c.l.b16 %v398
        %v938 = vunpack.c.h.b16 %v398
        %v939 = vunpack.c.l.b16 %v399
        %v940 = vunpack.c.h.b16 %v399
        %v941 = vunpack.c.l.b16 %v400
        %v942 = vunpack.c.h.b16 %v400
        %v943 = vunpack.c.l.b16 %v401
        %v944 = vunpack.c.h.b16 %v401
        %v945 = vunpack.c.l.b16 %v402
        %v946 = vunpack.c.h.b16 %v402
        %v947 = vunpack.c.l.b16 %v403
        %v948 = vunpack.c.h.b16 %v403
        %v949 = vunpack.c.l.b16 %v404
        %v950 = vunpack.c.h.b16 %v404
        %v951 = vunpack.c.l.b16 %v405
        %v952 = vunpack.c.h.b16 %v405
        %v953 = vunpack.c.l.b16 %v406
        %v954 = vunpack.c.h.b16 %v406
        %v955 = vunpack.c.l.b16 %v407
        %v956 = vunpack.c.h.b16 %v407
        %v957 = vunpack.c.l.b16 %v408
        %v958 = vunpack.c.h.b16 %v408
        %v959 = vunpack.c.l.b16 %v409
        %v960 = vunpack.c.h.b16 %v409
        %v961 = vunpack.c.l.b16 %v410
        %v962 = vunpack.c.h.b16 %v410
        %v963 = vunpack.c.l.b16 %v411
        %v964 = vunpack.c.h.b16 %v411
        %v965 = vunpack.c.l.b16 %v412
        %v966 = vunpack.c.h.b16 %v412
        %v967 = vunpack.c.l.b16 %v413
        %v968 = vunpack.c.h.b16 %v413
        %v969 = vunpack.c.l.b16 %v414
        %v970 = vunpack.c.h.b16 %v414
        %v971 = vunpack.c.l.b16 %v415
        %v972 = vunpack.c.h.b16 %v415
        %v973 = vunpack.c.l.b16 %v416
        %v974 = vunpack.c.h.b16 %v416
        %v975 = vunpack.c.l.b16 %v417
        %v976 = vunpack.c.h.b16 %v417
        %v977 = vunpack.c.l.b16 %v418
        %v978 = vunpack.c.h.b16 %v418
        %v979 = vunpack.c.l.b16 %v419
        %v980 = vunpack.c.h.b16 %v419
        %v981 = vunpack.c.l.b16 %v420
        %v982 = vunpack.c.h.b16 %v420
        %v983 = vunpack.c.l.b16 %v421
        %v984 = vunpack.c.h.b16 %v421
        %v985 = vunpack.c.l.b16 %v422
        %v986 = vunpack.c.h.b16 %v422
        %v987 = vunpack.c.l.b16 %v423
        %v988 = vunpack.c.h.b16 %v423
        %v989 = vunpack.c.l.b16 %v424
        %v990 = vunpack.c.h.b16 %v424
        %v991 = vunpack.c.l.b16 %v425
        %v992 = vunpack.c.h.b16 %v425
        %v993 = vunpack.c.l.b16 %v426
        %v994 = vunpack.c.h.b16 %v426
        %v995 = vunpack.c.l.b16 %v427
        %v996 = vunpack.c.h.b16 %v427
        %v997 = vunpack.c.l.b16 %v428
        %v998 = vunpack.c.h.b16 %v428
        %v999 = vunpack.c.l.b16 %v429
        %v1000 = vunpack.c.h.b16 %v429
        %v1001 = vunpack.c.l.b16 %v430
        %v1002 = vunpack.c.h.b16 %v430
        %v1003 = vunpack.c.l.b16 %v431
        %v1004 = vunpack.c.h.b16 %v431
        %v1005 = vunpack.c.l.b16 %v432
        %v1006 = vunpack.c.h.b16 %v432
        %v1007 = vunpack.c.l.b16 %v433
        %v1008 = vunpack.c.h.b16 %v433
        %v1009 = vunpack.c.l.b16 %v434
        %v1010 = vunpack.c.h.b16 %v434
        %v1011 = vunpack.c.l.b16 %v435
        %v1012 = vunpack.c.h.b16 %v435
        %v1013 = vunpack.c.l.b16 %v436
        %v1014 = vunpack.c.h.b16 %v436
        %v1015 = vunpack.c.l.b16 %v437
        %v1016 = vunpack.c.h.b16 %v437
        %v1017 = vunpack.c.l.b16 %v438
        %v1018 = vunpack.c.h.b16 %v438
        %v1019 = vunpack.c.l.b16 %v439
        %v1020 = vunpack.c.h.b16 %v439
        %v1021 = vunpack.c.l.b16 %v440
        %v1022 = vunpack.c.h.b16 %v440
        %v1023 = vunpack.c.l.b16 %v441
        %v1024 = vunpack.c.h.b16 %v441
        %v1025 = vunpack.c.l.b16 %v442
        %v1026 = vunpack.c.h.b16 %v442
        %v1027 = vunpack.c.l.b16 %v443
        %v1028 = vunpack.c.h.b16 %v443
        %v1029 = vunpack.c.l.b16 %v444
        %v1030 = vunpack.c.h.b16 %v444
        %v1031 = vunpack.c.l.b16 %v445
        %v1032 = vunpack.c.h.b16 %v445
        %v1033 = vunpack.c.l.b16 %v446
        %v1034 = vunpack.c.h.b16 %v446
        %v1035 = vunpack.c.l.b16 %v447
        %v1036 = vunpack.c.h.b16 %v447
        %v1037 = vunpack.c.l.b16 %v448
        %v1038 = vunpack.c.h.b16 %v448
        %v1039 = vunpack.c.l.b16 %v449
        %v1040 = vunpack.c.h.b16 %v449
        %v1041 = vunpack.c.l.b16 %v450
        %v1042 = vunpack.c.h.b16 %v450
        %v1043 = vunpack.c.l.b16 %v451
        %v1044 = vunpack.c.h.b16 %v451
        %v1045 = vunpack.c.l.b16 %v452
        %v1046 = vunpack.c.h.b16 %v452
        %v1047 = vunpack.c.l.b16 %v453
        %v1048 = vunpack.c.h.b16 %v453
        %v1049 = vunpack.c.l.b16 %v454
        %v1050 = vunpack.c.h.b16 %v454
        %v1051 = vunpack.c.l.b16 %v455
        %v1052 = vunpack.c.h.b16 %v455
        %v1053 = vunpack.c.l.b16 %v456
        %v1054 = vunpack.c.h.b16 %v456
        %v1055 = vunpack.c.l.b16 %v457
        %v1056 = vunpack.c.h.b16 %v457
        %v1057 = vunpack.c.l.b16 %v458
        %v1058 = vunpack.c.h.b16 %v458
        %v1059 = vunpack.c.l.b16 %v459
        %v1060 = vunpack.c.h.b16 %v459
        %v1061 = vunpack.c.l.b16 %v460
        %v1062 = vunpack.c.h.b16 %v460
        %v1063 = vunpack.c.l.b16 %v461
        %v1064 = vunpack.c.h.b16 %v461
        %v1065 = vunpack.c.l.b16 %v462
        %v1066 = vunpack.c.h.b16 %v462
        %v1067 = vunpack.c.l.b16 %v463
        %v1068 = vunpack.c.h.b16 %v463
        %v1069 = vunpack.c.l.b16 %v464
        %v1070 = vunpack.c.h.b16 %v464
        %v1071 = vunpack.c.l.b16 %v465
        %v1072 = vunpack.c.h.b16 %v465
        %v1073 = vunpack.c.l.b16 %v466
        %v1074 = vunpack.c.h.b16 %v466
        %v1075 = vunpack.c.l.b16 %v467
        %v1076 = vunpack.c.h.b16 %v467
        %v1077 = vunpack.c.l.b16 %v468
        %v1078 = vunpack.c.h.b16 %v468
        %v1079 = vunpack.c.l.b16 %v469
        %v1080 = vunpack.c.h.b16 %v469
        %v1081 = vunpack.c.l.b16 %v470
        %v1082 = vunpack.c.h.b16 %v470
        %v1083 = vunpack.c.l.b16 %v471
        %v1084 = vunpack.c.h.b16 %v471
        %v1085 = vunpack.c.l.b16 %v472
        %v1086 = vunpack.c.h.b16 %v472
        %v1087 = vunpack.c.l.b16 %v473
        %v1088 = vunpack.c.h.b16 %v473
        %v1089 = vunpack.c.l.b16 %v474
        %v1090 = vunpack.c.h.b16 %v474
        %v1091 = vunpack.c.l.b16 %v475
        %v1092 = vunpack.c.h.b16 %v475
        %v1093 = vunpack.c.l.b16 %v476
        %v1094 = vunpack.c.h.b16 %v476
        %v1095 = vunpack.c.l.b16 %v477
        %v1096 = vunpack.c.h.b16 %v477
        %v1097 = vunpack.c.l.b16 %v478
        %v1098 = vunpack.c.h.b16 %v478
        %v1099 = vunpack.c.l.b16 %v479
        %v1100 = vunpack.c.h.b16 %v479
        %v1101 = vunpack.c.l.b16 %v480
        %v1102 = vunpack.c.h.b16 %v480
        %v1103 = vunpack.c.l.b16 %v481
        %v1104 = vunpack.c.h.b16 %v481
        %v1105 = vunpack.c.l.b16 %v482
        %v1106 = vunpack.c.h.b16 %v482
        %v1107 = vunpack.c.l.b16 %v483
        %v1108 = vunpack.c.h.b16 %v483
        %v1109 = vunpack.c.l.b16 %v484
        %v1110 = vunpack.c.h.b16 %v484
        %v1111 = vunpack.c.l.b16 %v485
        %v1112 = vunpack.c.h.b16 %v485
        %v1113 = vunpack.c.l.b16 %v486
        %v1114 = vunpack.c.h.b16 %v486
        %v1115 = vunpack.c.l.b16 %v487
        %v1116 = vunpack.c.h.b16 %v487
        %v1117 = vunpack.c.l.b16 %v488
        %v1118 = vunpack.c.h.b16 %v488
        %v1119 = vunpack.c.l.b16 %v489
        %v1120 = vunpack.c.h.b16 %v489
        %v1121 = vunpack.c.l.b16 %v490
        %v1122 = vunpack.c.h.b16 %v490
        %v1123 = vunpack.c.l.b16 %v491
        %v1124 = vunpack.c.h.b16 %v491
        %v1125 = vunpack.c.l.b16 %v492
        %v1126 = vunpack.c.h.b16 %v492
        %v1127 = vunpack.c.l.b16 %v493
        %v1128 = vunpack.c.h.b16 %v493
        %v1129 = vunpack.c.l.b16 %v494
        %v1130 = vunpack.c.h.b16 %v494
        %v1131 = vunpack.c.l.b16 %v495
        %v1132 = vunpack.c.h.b16 %v495
        %v1133 = vunpack.c.l.b16 %v496
        %v1134 = vunpack.c.h.b16 %v496
        %v1135 = vunpack.c.l.b16 %v497
        %v1136 = vunpack.c.h.b16 %v497
        %v1137 = vunpack.c.l.b16 %v498
        %v1138 = vunpack.c.h.b16 %v498
        %v1139 = vunpack.c.l.b16 %v499
        %v1140 = vunpack.c.h.b16 %v499
        %v1141 = vunpack.c.l.b16 %v500
        %v1142 = vunpack.c.h.b16 %v500
        %v1143 = vunpack.c.l.b16 %v501
        %v1144 = vunpack.c.h.b16 %v501
        %v1145 = vunpack.c.l.b16 %v502
        %v1146 = vunpack.c.h.b16 %v502
        %v1147 = vunpack.c.l.b16 %v503
        %v1148 = vunpack.c.h.b16 %v503
        %v1149 = vunpack.c.l.b16 %v504
        %v1150 = vunpack.c.h.b16 %v504
        %v1151 = vunpack.c.l.b16 %v505
        %v1152 = vunpack.c.h.b16 %v505
        %v1153 = vunpack.c.l.b16 %v506
        %v1154 = vunpack.c.h.b16 %v506
        %v1155 = vunpack.c.l.b16 %v507
        %v1156 = vunpack.c.h.b16 %v507
        %v1157 = vunpack.c.l.b16 %v508
        %v1158 = vunpack.c.h.b16 %v508
        %v1159 = vunpack.c.l.b16 %v509
        %v1160 = vunpack.c.h.b16 %v509
        %v1161 = vunpack.c.l.b16 %v510
        %v1162 = vunpack.c.h.b16 %v510
        %v1163 = vunpack.c.l.b16 %v511
        %v1164 = vunpack.c.h.b16 %v511
        %v1165 = vunpack.c.l.b16 %v512
        %v1166 = vunpack.c.h.b16 %v512
        %v1167 = vunpack.c.l.b16 %v513
        %v1168 = vunpack.c.h.b16 %v513
        %v1169 = vunpack.c.l.b16 %v514
        %v1170 = vunpack.c.h.b16 %v514
        %v1171 = vunpack.c.l.b16 %v515
        %v1172 = vunpack.c.h.b16 %v515
        %v1173 = vunpack.c.l.b16 %v516
        %v1174 = vunpack.c.h.b16 %v516
        %v1175 = vunpack.c.l.b16 %v517
        %v1176 = vunpack.c.h.b16 %v517
        %v1177 = vunpack.c.l.b16 %v518
        %v1178 = vunpack.c.h.b16 %v518
        %v1179 = vunpack.c.l.b16 %v519
        %v1180 = vunpack.c.h.b16 %v519
        %v1181 = vunpack.c.l.b16 %v520
        %v1182 = vunpack.c.h.b16 %v520
        %v1183 = vunpack.c.l.b16 %v521
        %v1184 = vunpack.c.h.b16 %v521
        %v1185 = vunpack.c.l.b16 %v522
        %v1186 = vunpack.c.h.b16 %v522
        %v1187 = vunpack.c.l.b16 %v523
        %v1188 = vunpack.c.h.b16 %v523
        %v1189 = vunpack.c.l.b16 %v524
        %v1190 = vunpack.c.h.b16 %v524
        %v1191 = vunpack.c.l.b16 %v525
        %v1192 = vunpack.c.h.b16 %v525
        %v1193 = vunpack.c.l.b16 %v526
        %v1194 = vunpack.c.h.b16 %v526
        %v1195 = vunpack.c.l.b16 %v527
        %v1196 = vunpack.c.h.b16 %v527
        %v1197 = vunpack.c.l.b16 %v528
        %v1198 = vunpack.c.h.b16 %v528
        %v1199 = vunpack.c.l.b16 %v529
        %v1200 = vunpack.c.h.b16 %v529
        %v1201 = vunpack.c.l.b16 %v530
        %v1202 = vunpack.c.h.b16 %v530
        %v1203 = vunpack.c.l.b16 %v531
        %v1204 = vunpack.c.h.b16 %v531
        %v1205 = vunpack.c.l.b16 %v532
        %v1206 = vunpack.c.h.b16 %v532
        %v1207 = vunpack.c.l.b16 %v533
        %v1208 = vunpack.c.h.b16 %v533
        %v1209 = vunpack.c.l.b16 %v534
        %v1210 = vunpack.c.h.b16 %v534
        %v1211 = vunpack.c.l.b16 %v535
        %v1212 = vunpack.c.h.b16 %v535
        %v1213 = vunpack.c.l.b16 %v536
        %v1214 = vunpack.c.h.b16 %v536
        %v1215 = vunpack.c.l.b16 %v537
        %v1216 = vunpack.c.h.b16 %v537
        %v1217 = vunpack.c.l.b16 %v538
        %v1218 = vunpack.c.h.b16 %v538
        %v1219 = vunpack.c.l.b16 %v539
        %v1220 = vunpack.c.h.b16 %v539
        %v1221 = vunpack.c.l.b16 %v540
        %v1222 = vunpack.c.h.b16 %v540
        %v1223 = vunpack.c.l.b16 %v541
        %v1224 = vunpack.c.h.b16 %v541
        %v1225 = vunpack.c.l.b16 %v542
        %v1226 = vunpack.c.h.b16 %v542
        %v1227 = vunpack.c.l.b16 %v543
        %v1228 = vunpack.c.h.b16 %v543
        %v1229 = vunpack.c.l.b16 %v544
        %v1230 = vunpack.c.h.b16 %v544
        %v1231 = vunpack.c.l.b16 %v545
        %v1232 = vunpack.c.h.b16 %v545
        %v1233 = vunpack.c.l.b16 %v546
        %v1234 = vunpack.c.h.b16 %v546
        %v1235 = vunpack.c.l.b16 %v547
        %v1236 = vunpack.c.h.b16 %v547
        %v1237 = vunpack.c.l.b16 %v548
        %v1238 = vunpack.c.h.b16 %v548
        %v1239 = vunpack.c.l.b16 %v549
        %v1240 = vunpack.c.h.b16 %v549
        %v1241 = vunpack.c.l.b16 %v550
        %v1242 = vunpack.c.h.b16 %v550
        %v1243 = vunpack.c.l.b16 %v551
        %v1244 = vunpack.c.h.b16 %v551
        %v1245 = vunpack.c.l.b16 %v552
        %v1246 = vunpack.c.h.b16 %v552
        %v1247 = vunpack.c.l.b16 %v553
        %v1248 = vunpack.c.h.b16 %v553
        %v1249 = vunpack.c.l.b16 %v554
        %v1250 = vunpack.c.h.b16 %v554
        %v1251 = vunpack.c.l.b16 %v555
        %v1252 = vunpack.c.h.b16 %v555
        %v1253 = vunpack.c.l.b16 %v556
        %v1254 = vunpack.c.h.b16 %v556
        %v1255 = vunpack.c.l.b16 %v557
        %v1256 = vunpack.c.h.b16 %v557
        %v1257 = vunpack.c.l.b16 %v558
        %v1258 = vunpack.c.h.b16 %v558
        %v1259 = vunpack.c.l.b16 %v559
        %v1260 = vunpack.c.h.b16 %v559
        %v1261 = vunpack.c.l.b16 %v560
        %v1262 = vunpack.c.h.b16 %v560
        %v1263 = vunpack.c.l.b16 %v561
        %v1264 = vunpack.c.h.b16 %v561
        %v1265 = vunpack.c.l.b16 %v562
        %v1266 = vunpack.c.h.b16 %v562
        %v1267 = vunpack.c.l.b16 %v563
        %v1268 = vunpack.c.h.b16 %v563
        %v1269 = vunpack.c.l.b16 %v564
        %v1270 = vunpack.c.h.b16 %v564
        %v1271 = vunpack.c.l.b16 %v565
        %v1272 = vunpack.c.h.b16 %v565
        %v1273 = vunpack.c.l.b16 %v566
        %v1274 = vunpack.c.h.b16 %v566
        %v1275 = vunpack.c.l.b16 %v567
        %v1276 = vunpack.c.h.b16 %v567
        %v1277 = vunpack.c.l.b16 %v568
        %v1278 = vunpack.c.h.b16 %v568
        %v1279 = vunpack.c.l.b16 %v569
        %v1280 = vunpack.c.h.b16 %v569
        %v1281 = vunpack.c.l.b16 %v570
        %v1282 = vunpack.c.h.b16 %v570
        %v1283 = vunpack.c.l.b16 %v571
        %v1284 = vunpack.c.h.b16 %v571
        %v1285 = vunpack.c.l.b16 %v572
        %v1286 = vunpack.c.h.b16 %v572
        %v1287 = vunpack.c.l.b16 %v573
        %v1288 = vunpack.c.h.b16 %v573
        %v1289 = vunpack.c.l.b16 %v574
        %v1290 = vunpack.c.h.b16 %v574
        %v1291 = vunpack.c.l.b16 %v575
        %v1292 = vunpack.c.h.b16 %v575
        %v1293 = vunpack.c.l.b16 %v576
        %v1294 = vunpack.c.h.b16 %v576
        %v1295 = vunpack.c.l.b16 %v577
        %v1296 = vunpack.c.h.b16 %v577
        %v1297 = vunpack.c.l.b16 %v578
        %v1298 = vunpack.c.h.b16 %v578
        %v1299 = vunpack.c.l.b16 %v579
        %v1300 = vunpack.c.h.b16 %v579
        %v1301 = vunpack.c.l.b16 %v580
        %v1302 = vunpack.c.h.b16 %v580
        %v1303 = vunpack.c.l.b16 %v581
        %v1304 = vunpack.c.h.b16 %v581
        %v1305 = vunpack.c.l.b16 %v582
        %v1306 = vunpack.c.h.b16 %v582
        %v1307 = vunpack.c.l.b16 %v583
        %v1308 = vunpack.c.h.b16 %v583
        %v1309 = vunpack.c.l.b16 %v584
        %v1310 = vunpack.c.h.b16 %v584
        %v1311 = vunpack.c.l.b16 %v585
        %v1312 = vunpack.c.h.b16 %v585
        %v1313 = vunpack.c.l.b16 %v586
        %v1314 = vunpack.c.h.b16 %v586
        %v1315 = vunpack.c.l.b16 %v587
        %v1316 = vunpack.c.h.b16 %v587
        %v1317 = vunpack.c.l.b16 %v588
        %v1318 = vunpack.c.h.b16 %v588
        %v1319 = vunpack.c.l.b16 %v589
        %v1320 = vunpack.c.h.b16 %v589
        %v1321 = vunpack.c.l.b16 %v590
        %v1322 = vunpack.c.h.b16 %v590
        %v1323 = vunpack.c.l.b16 %v591
        %v1324 = vunpack.c.h.b16 %v591
        %v1325 = vunpack.c.l.b16 %v592
        %v1326 = vunpack.c.h.b16 %v592
        %v1327 = vunpack.c.l.b16 %v593
        %v1328 = vunpack.c.h.b16 %v593
        %v1329 = vunpack.c.l.b16 %v594
        %v1330 = vunpack.c.h.b16 %v594
        %v1331 = vunpack.c.l.b16 %v595
        %v1332 = vunpack.c.h.b16 %v595
        %v1333 = vunpack.c.l.b16 %v596
        %v1334 = vunpack.c.h.b16 %v596
        %v1335 = vunpack.c.l.b16 %v597
        %v1336 = vunpack.c.h.b16 %v597
        %v1337 = vunpack.c.l.b16 %v598
        %v1338 = vunpack.c.h.b16 %v598
        %v1339 = vunpack.c.l.b16 %v599
        %v1340 = vunpack.c.h.b16 %v599
        %v1341 = vunpack.c.l.b16 %v600
        %v1342 = vunpack.c.h.b16 %v600
        %v1343 = vunpack.c.l.b16 %v601
        %v1344 = vunpack.c.h.b16 %v601
        %v1345 = vunpack.c.l.b16 %v602
        %v1346 = vunpack.c.h.b16 %v602
        %v1347 = vunpack.c.l.b16 %v603
        %v1348 = vunpack.c.h.b16 %v603
        %v1349 = vunpack.c.l.b16 %v604
        %v1350 = vunpack.c.h.b16 %v604
        %v1351 = vunpack.c.l.b16 %v605
        %v1352 = vunpack.c.h.b16 %v605
        %v1353 = vunpack.c.l.b16 %v606
        %v1354 = vunpack.c.h.b16 %v606
        %v1355 = vunpack.c.l.b16 %v607
        %v1356 = vunpack.c.h.b16 %v607
        %v1357 = vunpack.c.l.b16 %v608
        %v1358 = vunpack.c.h.b16 %v608
        %v1359 = vunpack.c.l.b16 %v609
        %v1360 = vunpack.c.h.b16 %v609
        %v1361 = vunpack.c.l.b16 %v610
        %v1362 = vunpack.c.h.b16 %v610
        %v1363 = vunpack.c.l.b16 %v611
        %v1364 = vunpack.c.h.b16 %v611
        %v1365 = vunpack.c.l.b16 %v612
        %v1366 = vunpack.c.h.b16 %v612
        %v1367 = vunpack.c.l.b16 %v613
        %v1368 = vunpack.c.h.b16 %v613
        %v1369 = vunpack.c.l.b16 %v614
        %v1370 = vunpack.c.h.b16 %v614
        %v1371 = vunpack.c.l.b16 %v615
        %v1372 = vunpack.c.h.b16 %v615
        %v1373 = vunpack.c.l.b16 %v616
        %v1374 = vunpack.c.h.b16 %v616
        %v1375 = vunpack.c.l.b16 %v617
        %v1376 = vunpack.c.h.b16 %v617
        %v1377 = vunpack.c.l.b16 %v618
        %v1378 = vunpack.c.h.b16 %v618
        %v1379 = vunpack.c.l.b16 %v619
        %v1380 = vunpack.c.h.b16 %v619
        %v1381 = vunpack.c.l.b16 %v620
        %v1382 = vunpack.c.h.b16 %v620
        %v1383 = vunpack.c.l.b16 %v621
        %v1384 = vunpack.c.h.b16 %v621
        %v1385 = vunpack.c.l.b16 %v622
        %v1386 = vunpack.c.h.b16 %v622
        %v1387 = vunpack.c.l.b16 %v623
        %v1388 = vunpack.c.h.b16 %v623
        %v1389 = vunpack.c.l.b16 %v624
        %v1390 = vunpack.c.h.b16 %v624
        %v1391 = vunpack.c.l.b16 %v625
        %v1392 = vunpack.c.h.b16 %v625
        %v1393 = vunpack.c.l.b16 %v626
        %v1394 = vunpack.c.h.b16 %v626
        %v1395 = vunpack.c.l.b16 %v627
        %v1396 = vunpack.c.h.b16 %v627
        %v1397 = vunpack.c.l.b16 %v628
        %v1398 = vunpack.c.h.b16 %v628
        %v1399 = vunpack.c.l.b16 %v629
        %v1400 = vunpack.c.h.b16 %v629
        %v1401 = vunpack.c.l.b16 %v630
        %v1402 = vunpack.c.h.b16 %v630
        %v1403 = vunpack.c.l.b16 %v631
        %v1404 = vunpack.c.h.b16 %v631
        %v1405 = vunpack.c.l.b16 %v632
        %v1406 = vunpack.c.h.b16 %v632
        %v1407 = vunpack.c.l.b16 %v633
        %v1408 = vunpack.c.h.b16 %v633
        %v1409 = vunpack.c.l.b16 %v634
        %v1410 = vunpack.c.h.b16 %v634
        %v1411 = vunpack.c.l.b16 %v635
        %v1412 = vunpack.c.h.b16 %v635
        %v1413 = vunpack.c.l.b16 %v636
        %v1414 = vunpack.c.h.b16 %v636
        %v1415 = vunpack.c.l.b16 %v637
        %v1416 = vunpack.c.h.b16 %v637
        %v1417 = vunpack.c.l.b16 %v638
        %v1418 = vunpack.c.h.b16 %v638
        %v1419 = vunpack.c.l.b16 %v639
        %v1420 = vunpack.c.h.b16 %v639
        %v1421 = vunpack.c.l.b16 %v640
        %v1422 = vunpack.c.h.b16 %v640
        %v1423 = vunpack.c.l.b16 %v641
        %v1424 = vunpack.c.h.b16 %v641
        %v1425 = vunpack.c.l.b16 %v642
        %v1426 = vunpack.c.h.b16 %v642
        %v1427 = vunpack.c.l.b16 %v643
        %v1428 = vunpack.c.h.b16 %v643
        %v1429 = vunpack.c.l.b16 %v644
        %v1430 = vunpack.c.h.b16 %v644
        %v1431 = vunpack.c.l.b16 %v645
        %v1432 = vunpack.c.h.b16 %v645
        %v1433 = vunpack.c.l.b16 %v646
        %v1434 = vunpack.c.h.b16 %v646
        %v1435 = vpack.c.b16 %v931, %v923
        %v1436 = vpack.c.b16 %v932, %v924
        %v1437 = vpack.c.b16 %v933, %v925
        %v1438 = vpack.c.b16 %v934, %v926
        %v1439 = vpack.c.b16 %v935, %v927
        %v1440 = vpack.c.b16 %v936, %v928
        %v1441 = vpack.c.b16 %v937, %v929
        %v1442 = vpack.c.b16 %v938, %v930
        %v1443 = vpack.c.b16 %v947, %v939
        %v1444 = vpack.c.b16 %v948, %v940
        %v1445 = vpack.c.b16 %v949, %v941
        %v1446 = vpack.c.b16 %v950, %v942
        %v1447 = vpack.c.b16 %v951, %v943
        %v1448 = vpack.c.b16 %v952, %v944
        %v1449 = vpack.c.b16 %v953, %v945
        %v1450 = vpack.c.b16 %v954, %v946
        %v1451 = vpack.c.b16 %v963, %v955
        %v1452 = vpack.c.b16 %v964, %v956
        %v1453 = vpack.c.b16 %v965, %v957
        %v1454 = vpack.c.b16 %v966, %v958
        %v1455 = vpack.c.b16 %v967, %v959
        %v1456 = vpack.c.b16 %v968, %v960
        %v1457 = vpack.c.b16 %v969, %v961
        %v1458 = vpack.c.b16 %v970, %v962
        %v1459 = vpack.c.b16 %v979, %v971
        %v1460 = vpack.c.b16 %v980, %v972
        %v1461 = vpack.c.b16 %v981, %v973
        %v1462 = vpack.c.b16 %v982, %v974
        %v1463 = vpack.c.b16 %v983, %v975
        %v1464 = vpack.c.b16 %v984, %v976
        %v1465 = vpack.c.b16 %v985, %v977
        %v1466 = vpack.c.b16 %v986, %v978
        %v1467 = vpack.c.b16 %v995, %v987
        %v1468 = vpack.c.b16 %v996, %v988
        %v1469 = vpack.c.b16 %v997, %v989
        %v1470 = vpack.c.b16 %v998, %v990
        %v1471 = vpack.c.b16 %v999, %v991
        %v1472 = vpack.c.b16 %v1000, %v992
        %v1473 = vpack.c.b16 %v1001, %v993
        %v1474 = vpack.c.b16 %v1002, %v994
        %v1475 = vpack.c.b16 %v1011, %v1003
        %v1476 = vpack.c.b16 %v1012, %v1004
        %v1477 = vpack.c.b16 %v1013, %v1005
        %v1478 = vpack.c.b16 %v1014, %v1006
        %v1479 = vpack.c.b16 %v1015, %v1007
        %v1480 = vpack.c.b16 %v1016, %v1008
        %v1481 = vpack.c.b16 %v1017, %v1009
        %v1482 = vpack.c.b16 %v1018, %v1010
        %v1483 = vpack.c.b16 %v1027, %v1019
        %v1484 = vpack.c.b16 %v1028, %v1020
        %v1485 = vpack.c.b16 %v1029, %v1021
        %v1486 = vpack.c.b16 %v1030, %v1022
        %v1487 = vpack.c.b16 %v1031, %v1023
        %v1488 = vpack.c.b16 %v1032, %v1024
        %v1489 = vpack.c.b16 %v1033, %v1025
        %v1490 = vpack.c.b16 %v1034, %v1026
        %v1491 = vpack.c.b16 %v1043, %v1035
        %v1492 = vpack.c.b16 %v1044, %v1036
        %v1493 = vpack.c.b16 %v1045, %v1037
        %v1494 = vpack.c.b16 %v1046, %v1038
        %v1495 = vpack.c.b16 %v1047, %v1039
        %v1496 = vpack.c.b16 %v1048, %v1040
        %v1497 = vpack.c.b16 %v1049, %v1041
        %v1498 = vpack.c.b16 %v1050, %v1042
        %v1499 = vpack.c.b16 %v1059, %v1051
        %v1500 = vpack.c.b16 %v1060, %v1052
        %v1501 = vpack.c.b16 %v1061, %v1053
        %v1502 = vpack.c.b16 %v1062, %v1054
        %v1503 = vpack.c.b16 %v1063, %v1055
        %v1504 = vpack.c.b16 %v1064, %v1056
        %v1505 = vpack.c.b16 %v1065, %v1057
        %v1506 = vpack.c.b16 %v1066, %v1058
        %v1507 = vpack.c.b16 %v1075, %v1067
        %v1508 = vpack.c.b16 %v1076, %v1068
        %v1509 = vpack.c.b16 %v1077, %v1069
        %v1510 = vpack.c.b16 %v1078, %v1070
        %v1511 = vpack.c.b16 %v1079, %v1071
        %v1512 = vpack.c.b16 %v1080, %v1072
        %v1513 = vpack.c.b16 %v1081, %v1073
        %v1514 = vpack.c.b16 %v1082, %v1074
        %v1515 = vpack.c.b16 %v1091, %v1083
        %v1516 = vpack.c.b16 %v1092, %v1084
        %v1517 = vpack.c.b16 %v1093, %v1085
        %v1518 = vpack.c.b16 %v1094, %v1086
        %v1519 = vpack.c.b16 %v1095, %v1087
        %v1520 = vpack.c.b16 %v1096, %v1088
        %v1521 = vpack.c.b16 %v1097, %v1089
        %v1522 = vpack.c.b16 %v1098, %v1090
        %v1523 = vpack.c.b16 %v1107, %v1099
        %v1524 = vpack.c.b16 %v1108, %v1100
        %v1525 = vpack.c.b16 %v1109, %v1101
        %v1526 = vpack.c.b16 %v1110, %v1102
        %v1527 = vpack.c.b16 %v1111, %v1103
        %v1528 = vpack.c.b16 %v1112, %v1104
        %v1529 = vpack.c.b16 %v1113, %v1105
        %v1530 = vpack.c.b16 %v1114, %v1106
        %v1531 = vpack.c.b16 %v1123, %v1115
        %v1532 = vpack.c.b16 %v1124, %v1116
        %v1533 = vpack.c.b16 %v1125, %v1117
        %v1534 = vpack.c.b16 %v1126, %v1118
        %v1535 = vpack.c.b16 %v1127, %v1119
        %v1536 = vpack.c.b16 %v1128, %v1120
        %v1537 = vpack.c.b16 %v1129, %v1121
        %v1538 = vpack.c.b16 %v1130, %v1122
        %v1539 = vpack.c.b16 %v1139, %v1131
        %v1540 = vpack.c.b16 %v1140, %v1132
        %v1541 = vpack.c.b16 %v1141, %v1133
        %v1542 = vpack.c.b16 %v1142, %v1134
        %v1543 = vpack.c.b16 %v1143, %v1135
        %v1544 = vpack.c.b16 %v1144, %v1136
        %v1545 = vpack.c.b16 %v1145, %v1137
        %v1546 = vpack.c.b16 %v1146, %v1138
        %v1547 = vpack.c.b16 %v1155, %v1147
        %v1548 = vpack.c.b16 %v1156, %v1148
        %v1549 = vpack.c.b16 %v1157, %v1149
        %v1550 = vpack.c.b16 %v1158, %v1150
        %v1551 = vpack.c.b16 %v1159, %v1151
        %v1552 = vpack.c.b16 %v1160, %v1152
        %v1553 = vpack.c.b16 %v1161, %v1153
        %v1554 = vpack.c.b16 %v1162, %v1154
        %v1555 = vpack.c.b16 %v1171, %v1163
        %v1556 = vpack.c.b16 %v1172, %v1164
        %v1557 = vpack.c.b16 %v1173, %v1165
        %v1558 = vpack.c.b16 %v1174, %v1166
        %v1559 = vpack.c.b16 %v1175, %v1167
        %v1560 = vpack.c.b16 %v1176, %v1168
        %v1561 = vpack.c.b16 %v1177, %v1169
        %v1562 = vpack.c.b16 %v1178, %v1170
        %v1563 = vpack.c.b16 %v1187, %v1179
        %v1564 = vpack.c.b16 %v1188, %v1180
        %v1565 = vpack.c.b16 %v1189, %v1181
        %v1566 = vpack.c.b16 %v1190, %v1182
        %v1567 = vpack.c.b16 %v1191, %v1183
        %v1568 = vpack.c.b16 %v1192, %v1184
        %v1569 = vpack.c.b16 %v1193, %v1185
        %v1570 = vpack.c.b16 %v1194, %v1186
        %v1571 = vpack.c.b16 %v1203, %v1195
        %v1572 = vpack.c.b16 %v1204, %v1196
        %v1573 = vpack.c.b16 %v1205, %v1197
        %v1574 = vpack.c.b16 %v1206, %v1198
        %v1575 = vpack.c.b16 %v1207, %v1199
        %v1576 = vpack.c.b16 %v1208, %v1200
        %v1577 = vpack.c.b16 %v1209, %v1201
        %v1578 = vpack.c.b16 %v1210, %v1202
        %v1579 = vpack.c.b16 %v1219, %v1211
        %v1580 = vpack.c.b16 %v1220, %v1212
        %v1581 = vpack.c.b16 %v1221, %v1213
        %v1582 = vpack.c.b16 %v1222, %v1214
        %v1583 = vpack.c.b16 %v1223, %v1215
        %v1584 = vpack.c.b16 %v1224, %v1216
        %v1585 = vpack.c.b16 %v1225, %v1217
        %v1586 = vpack.c.b16 %v1226, %v1218
        %v1587 = vpack.c.b16 %v1235, %v1227
        %v1588 = vpack.c.b16 %v1236, %v1228
        %v1589 = vpack.c.b16 %v1237, %v1229
        %v1590 = vpack.c.b16 %v1238, %v1230
        %v1591 = vpack.c.b16 %v1239, %v1231
        %v1592 = vpack.c.b16 %v1240, %v1232
        %v1593 = vpack.c.b16 %v1241, %v1233
        %v1594 = vpack.c.b16 %v1242, %v1234
        %v1595 = vpack.c.b16 %v1251, %v1243
        %v1596 = vpack.c.b16 %v1252, %v1244
        %v1597 = vpack.c.b16 %v1253, %v1245
        %v1598 = vpack.c.b16 %v1254, %v1246
        %v1599 = vpack.c.b16 %v1255, %v1247
        %v1600 = vpack.c.b16 %v1256, %v1248
        %v1601 = vpack.c.b16 %v1257, %v1249
        %v1602 = vpack.c.b16 %v1258, %v1250
        %v1603 = vpack.c.b16 %v1267, %v1259
        %v1604 = vpack.c.b16 %v1268, %v1260
        %v1605 = vpack.c.b16 %v1269, %v1261
        %v1606 = vpack.c.b16 %v1270, %v1262
        %v1607 = vpack.c.b16 %v1271, %v1263
        %v1608 = vpack.c.b16 %v1272, %v1264
        %v1609 = vpack.c.b16 %v1273, %v1265
        %v1610 = vpack.c.b16 %v1274, %v1266
        %v1611 = vpack.c.b16 %v1283, %v1275
        %v1612 = vpack.c.b16 %v1284, %v1276
        %v1613 = vpack.c.b16 %v1285, %v1277
        %v1614 = vpack.c.b16 %v1286, %v1278
        %v1615 = vpack.c.b16 %v1287, %v1279
        %v1616 = vpack.c.b16 %v1288, %v1280
        %v1617 = vpack.c.b16 %v1289, %v1281
        %v1618 = vpack.c.b16 %v1290, %v1282
        %v1619 = vpack.c.b16 %v1299, %v1291
        %v1620 = vpack.c.b16 %v1300, %v1292
        %v1621 = vpack.c.b16 %v1301, %v1293
        %v1622 = vpack.c.b16 %v1302, %v1294
        %v1623 = vpack.c.b16 %v1303, %v1295
        %v1624 = vpack.c.b16 %v1304, %v1296
        %v1625 = vpack.c.b16 %v1305, %v1297
        %v1626 = vpack.c.b16 %v1306, %v1298
        %v1627 = vpack.c.b16 %v1315, %v1307
        %v1628 = vpack.c.b16 %v1316, %v1308
        %v1629 = vpack.c.b16 %v1317, %v1309
        %v1630 = vpack.c.b16 %v1318, %v1310
        %v1631 = vpack.c.b16 %v1319, %v1311
        %v1632 = vpack.c.b16 %v1320, %v1312
        %v1633 = vpack.c.b16 %v1321, %v1313
        %v1634 = vpack.c.b16 %v1322, %v1314
        %v1635 = vpack.c.b16 %v1331, %v1323
        %v1636 = vpack.c.b16 %v1332, %v1324
        %v1637 = vpack.c.b16 %v1333, %v1325
        %v1638 = vpack.c.b16 %v1334, %v1326
        %v1639 = vpack.c.b16 %v1335, %v1327
        %v1640 = vpack.c.b16 %v1336, %v1328
        %v1641 = vpack.c.b16 %v1337, %v1329
        %v1642 = vpack.c.b16 %v1338, %v1330
        %v1643 = vpack.c.b16 %v1347, %v1339
        %v1644 = vpack.c.b16 %v1348, %v1340
        %v1645 = vpack.c.b16 %v1349, %v1341
        %v1646 = vpack.c.b16 %v1350, %v1342
        %v1647 = vpack.c.b16 %v1351, %v1343
        %v1648 = vpack.c.b16 %v1352, %v1344
        %v1649 = vpack.c.b16 %v1353, %v1345
        %v1650 = vpack.c.b16 %v1354, %v1346
        %v1651 = vpack.c.b16 %v1363, %v1355
        %v1652 = vpack.c.b16 %v1364, %v1356
        %v1653 = vpack.c.b16 %v1365, %v1357
        %v1654 = vpack.c.b16 %v1366, %v1358
        %v1655 = vpack.c.b16 %v1367, %v1359
        %v1656 = vpack.c.b16 %v1368, %v1360
        %v1657 = vpack.c.b16 %v1369, %v1361
        %v1658 = vpack.c.b16 %v1370, %v1362
        %v1659 = vpack.c.b16 %v1379, %v1371
        %v1660 = vpack.c.b16 %v1380, %v1372
        %v1661 = vpack.c.b16 %v1381, %v1373
        %v1662 = vpack.c.b16 %v1382, %v1374
        %v1663 = vpack.c.b16 %v1383, %v1375
        %v1664 = vpack.c.b16 %v1384, %v1376
        %v1665 = vpack.c.b16 %v1385, %v1377
        %v1666 = vpack.c.b16 %v1386, %v1378
        %v1667 = vpack.c.b16 %v1395, %v1387
        %v1668 = vpack.c.b16 %v1396, %v1388
        %v1669 = vpack.c.b16 %v1397, %v1389
        %v1670 = vpack.c.b16 %v1398, %v1390
        %v1671 = vpack.c.b16 %v1399, %v1391
        %v1672 = vpack.c.b16 %v1400, %v1392
        %v1673 = vpack.c.b16 %v1401, %v1393
        %v1674 = vpack.c.b16 %v1402, %v1394
        %v1675 = vpack.c.b16 %v1411, %v1403
        %v1676 = vpack.c.b16 %v1412, %v1404
        %v1677 = vpack.c.b16 %v1413, %v1405
        %v1678 = vpack.c.b16 %v1414, %v1406
        %v1679 = vpack.c.b16 %v1415, %v1407
        %v1680 = vpack.c.b16 %v1416, %v1408
        %v1681 = vpack.c.b16 %v1417, %v1409
        %v1682 = vpack.c.b16 %v1418, %v1410
        %v1683 = vpack.c.b16 %v1427, %v1419
        %v1684 = vpack.c.b16 %v1428, %v1420
        %v1685 = vpack.c.b16 %v1429, %v1421
        %v1686 = vpack.c.b16 %v1430, %v1422
        %v1687 = vpack.c.b16 %v1431, %v1423
        %v1688 = vpack.c.b16 %v1432, %v1424
        %v1689 = vpack.c.b16 %v1433, %v1425
        %v1690 = vpack.c.b16 %v1434, %v1426
        %1947 = vmatprep.subr.bf16.mxu0 %v1436
        %1948 = vmatpush1.bf16.msra.mxu0 %v1435
        %1949 = vmatprep.subr.bf16.mxu0 %v1444
        %1950 = vmatpush1.bf16.msra.mxu0 %v1443
        %1951 = vmatprep.subr.bf16.mxu0 %v1452
        %1952 = vmatpush1.bf16.msra.mxu0 %v1451
        %1953 = vmatprep.subr.bf16.mxu0 %v1460
        %1954 = vmatpush1.bf16.msra.mxu0 %v1459
        %1955 = vmatprep.subr.bf16.mxu0 %v1468
        %1956 = vmatpush1.bf16.msra.mxu0 %v1467
        %1957 = vmatprep.subr.bf16.mxu0 %v1476
        %1958 = vmatpush1.bf16.msra.mxu0 %v1475
        %1959 = vmatprep.subr.bf16.mxu0 %v1484
        %1960 = vmatpush1.bf16.msra.mxu0 %v1483
        %1961 = vmatprep.subr.bf16.mxu0 %v1492
        %1962 = vmatpush1.bf16.msra.mxu0 %v1491
        %1963 = vmatprep.subr.bf16.mxu0 %v1500
        %1964 = vmatpush1.bf16.msra.mxu0 %v1499
        %1965 = vmatprep.subr.bf16.mxu0 %v1508
        %1966 = vmatpush1.bf16.msra.mxu0 %v1507
        %1967 = vmatprep.subr.bf16.mxu0 %v1516
        %1968 = vmatpush1.bf16.msra.mxu0 %v1515
        %1969 = vmatprep.subr.bf16.mxu0 %v1524
        %1970 = vmatpush1.bf16.msra.mxu0 %v1523
        %1971 = vmatprep.subr.bf16.mxu0 %v1532
        %1972 = vmatpush1.bf16.msra.mxu0 %v1531
        %1973 = vmatprep.subr.bf16.mxu0 %v1540
        %1974 = vmatpush1.bf16.msra.mxu0 %v1539
        %1975 = vmatprep.subr.bf16.mxu0 %v1548
        %1976 = vmatpush1.bf16.msra.mxu0 %v1547
        %1977 = vmatprep.subr.bf16.mxu0 %v1556
        %1978 = vmatpush1.bf16.msra.mxu0 %v1555
        %1979 = vmatprep.mubr.bf16.mxu0 %v660
        %1980 = vmatmul.mubr.bf16.gmra.mrb[0].mxu0 %v659
        %v1981 = vpop.f32.mrb[0].mxu0
        %v1982 = vadd.f32 0.0, %v1981
        %v1983 = vpop.f32.mrb[0].mxu0
        %v1984 = vadd.f32 0.0, %v1983
        %v1985 = vpop.f32.mrb[0].mxu0
        %v1986 = vadd.f32 0.0, %v1985
        %v1987 = vpop.f32.mrb[0].mxu0
        %v1988 = vadd.f32 0.0, %v1987
        %1989 = vdwg.mxu0
        %1990 = vmatprep.subr.bf16.mxu0 %v1564
        %1991 = vmatpush1.bf16.msra.mxu0 %v1563
        %1992 = vmatprep.subr.bf16.mxu0 %v1572
        %1993 = vmatpush1.bf16.msra.mxu0 %v1571
        %1994 = vmatprep.subr.bf16.mxu0 %v1580
        %1995 = vmatpush1.bf16.msra.mxu0 %v1579
        %1996 = vmatprep.subr.bf16.mxu0 %v1588
        %1997 = vmatpush1.bf16.msra.mxu0 %v1587
        %1998 = vmatprep.subr.bf16.mxu0 %v1596
        %1999 = vmatpush1.bf16.msra.mxu0 %v1595
        %2000 = vmatprep.subr.bf16.mxu0 %v1604
        %2001 = vmatpush1.bf16.msra.mxu0 %v1603
        %2002 = vmatprep.subr.bf16.mxu0 %v1612
        %2003 = vmatpush1.bf16.msra.mxu0 %v1611
        %2004 = vmatprep.subr.bf16.mxu0 %v1620
        %2005 = vmatpush1.bf16.msra.mxu0 %v1619
        %2006 = vmatprep.subr.bf16.mxu0 %v1628
        %2007 = vmatpush1.bf16.msra.mxu0 %v1627
        %2008 = vmatprep.subr.bf16.mxu0 %v1636
        %2009 = vmatpush1.bf16.msra.mxu0 %v1635
        %2010 = vmatprep.subr.bf16.mxu0 %v1644
        %2011 = vmatpush1.bf16.msra.mxu0 %v1643
        %2012 = vmatprep.subr.bf16.mxu0 %v1652
        %2013 = vmatpush1.bf16.msra.mxu0 %v1651
        %2014 = vmatprep.subr.bf16.mxu0 %v1660
        %2015 = vmatpush1.bf16.msra.mxu0 %v1659
        %2016 = vmatprep.subr.bf16.mxu0 %v1668
        %2017 = vmatpush1.bf16.msra.mxu0 %v1667
        %2018 = vmatprep.subr.bf16.mxu0 %v1676
        %2019 = vmatpush1.bf16.msra.mxu0 %v1675
        %2020 = vmatprep.subr.bf16.mxu0 %v1684
        %2021 = vmatpush1.bf16.msra.mxu0 %v1683
        %2022 = vmatprep.mubr.bf16.mxu0 %v662
        %2023 = vmatmul.mubr.bf16.gmra.mrb[0].mxu0 %v661
        %v2024 = vpop.f32.mrb[0].mxu0
        %v2025 = vadd.f32 %v1982, %v2024
        %v2026 = vpop.f32.mrb[0].mxu0
        %v2027 = vadd.f32 %v1984, %v2026
        %v2028 = vpop.f32.mrb[0].mxu0
        %v2029 = vadd.f32 %v1986, %v2028
        %v2030 = vpop.f32.mrb[0].mxu0
        %v2031 = vadd.f32 %v1988, %v2030
        %2032 = vdwg.mxu0
        %2033 = vmatprep.subr.bf16.mxu0 %v1438
        %2034 = vmatpush1.bf16.msra.mxu0 %v1437
        %2035 = vmatprep.subr.bf16.mxu0 %v1446
        %2036 = vmatpush1.bf16.msra.mxu0 %v1445
        %2037 = vmatprep.subr.bf16.mxu0 %v1454
        %2038 = vmatpush1.bf16.msra.mxu0 %v1453
        %2039 = vmatprep.subr.bf16.mxu0 %v1462
        %2040 = vmatpush1.bf16.msra.mxu0 %v1461
        %2041 = vmatprep.subr.bf16.mxu0 %v1470
        %2042 = vmatpush1.bf16.msra.mxu0 %v1469
        %2043 = vmatprep.subr.bf16.mxu0 %v1478
        %2044 = vmatpush1.bf16.msra.mxu0 %v1477
        %2045 = vmatprep.subr.bf16.mxu0 %v1486
        %2046 = vmatpush1.bf16.msra.mxu0 %v1485
        %2047 = vmatprep.subr.bf16.mxu0 %v1494
        %2048 = vmatpush1.bf16.msra.mxu0 %v1493
        %2049 = vmatprep.subr.bf16.mxu0 %v1502
        %2050 = vmatpush1.bf16.msra.mxu0 %v1501
        %2051 = vmatprep.subr.bf16.mxu0 %v1510
        %2052 = vmatpush1.bf16.msra.mxu0 %v1509
        %2053 = vmatprep.subr.bf16.mxu0 %v1518
        %2054 = vmatpush1.bf16.msra.mxu0 %v1517
        %2055 = vmatprep.subr.bf16.mxu0 %v1526
        %2056 = vmatpush1.bf16.msra.mxu0 %v1525
        %2057 = vmatprep.subr.bf16.mxu0 %v1534
        %2058 = vmatpush1.bf16.msra.mxu0 %v1533
        %2059 = vmatprep.subr.bf16.mxu0 %v1542
        %2060 = vmatpush1.bf16.msra.mxu0 %v1541
        %2061 = vmatprep.subr.bf16.mxu0 %v1550
        %2062 = vmatpush1.bf16.msra.mxu0 %v1549
        %2063 = vmatprep.subr.bf16.mxu0 %v1558
        %2064 = vmatpush1.bf16.msra.mxu0 %v1557
        %2065 = vmatprep.mubr.bf16.mxu0 %v660
        %2066 = vmatmul.mubr.bf16.gmra.mrb[0].mxu0 %v659
        %v2067 = vpop.f32.mrb[0].mxu0
        %v2068 = vadd.f32 0.0, %v2067
        %v2069 = vpop.f32.mrb[0].mxu0
        %v2070 = vadd.f32 0.0, %v2069
        %v2071 = vpop.f32.mrb[0].mxu0
        %v2072 = vadd.f32 0.0, %v2071
        %v2073 = vpop.f32.mrb[0].mxu0
        %v2074 = vadd.f32 0.0, %v2073
        %2075 = vdwg.mxu0
        %2076 = vmatprep.subr.bf16.mxu0 %v1566
        %2077 = vmatpush1.bf16.msra.mxu0 %v1565
        %2078 = vmatprep.subr.bf16.mxu0 %v1574
        %2079 = vmatpush1.bf16.msra.mxu0 %v1573
        %2080 = vmatprep.subr.bf16.mxu0 %v1582
        %2081 = vmatpush1.bf16.msra.mxu0 %v1581
        %2082 = vmatprep.subr.bf16.mxu0 %v1590
        %2083 = vmatpush1.bf16.msra.mxu0 %v1589
        %2084 = vmatprep.subr.bf16.mxu0 %v1598
        %2085 = vmatpush1.bf16.msra.mxu0 %v1597
        %2086 = vmatprep.subr.bf16.mxu0 %v1606
        %2087 = vmatpush1.bf16.msra.mxu0 %v1605
        %2088 = vmatprep.subr.bf16.mxu0 %v1614
        %2089 = vmatpush1.bf16.msra.mxu0 %v1613
        %2090 = vmatprep.subr.bf16.mxu0 %v1622
        %2091 = vmatpush1.bf16.msra.mxu0 %v1621
        %2092 = vmatprep.subr.bf16.mxu0 %v1630
        %2093 = vmatpush1.bf16.msra.mxu0 %v1629
        %2094 = vmatprep.subr.bf16.mxu0 %v1638
        %2095 = vmatpush1.bf16.msra.mxu0 %v1637
        %2096 = vmatprep.subr.bf16.mxu0 %v1646
        %2097 = vmatpush1.bf16.msra.mxu0 %v1645
        %2098 = vmatprep.subr.bf16.mxu0 %v1654
        %2099 = vmatpush1.bf16.msra.mxu0 %v1653
        %2100 = vmatprep.subr.bf16.mxu0 %v1662
        %2101 = vmatpush1.bf16.msra.mxu0 %v1661
        %2102 = vmatprep.subr.bf16.mxu0 %v1670
        %2103 = vmatpush1.bf16.msra.mxu0 %v1669
        %2104 = vmatprep.subr.bf16.mxu0 %v1678
        %2105 = vmatpush1.bf16.msra.mxu0 %v1677
        %2106 = vmatprep.subr.bf16.mxu0 %v1686
        %2107 = vmatpush1.bf16.msra.mxu0 %v1685
        %2108 = vmatprep.mubr.bf16.mxu0 %v662
        %2109 = vmatmul.mubr.bf16.gmra.mrb[0].mxu0 %v661
        %v2110 = vpop.f32.mrb[0].mxu0
        %v2111 = vadd.f32 %v2068, %v2110
        %v2112 = vpop.f32.mrb[0].mxu0
        %v2113 = vadd.f32 %v2070, %v2112
        %v2114 = vpop.f32.mrb[0].mxu0
        %v2115 = vadd.f32 %v2072, %v2114
        %v2116 = vpop.f32.mrb[0].mxu0
        %v2117 = vadd.f32 %v2074, %v2116
        %2118 = vdwg.mxu0
        %2119 = vmatprep.subr.bf16.mxu0 %v1440
        %2120 = vmatpush1.bf16.msra.mxu0 %v1439
        %2121 = vmatprep.subr.bf16.mxu0 %v1448
        %2122 = vmatpush1.bf16.msra.mxu0 %v1447
        %2123 = vmatprep.subr.bf16.mxu0 %v1456
        %2124 = vmatpush1.bf16.msra.mxu0 %v1455
        %2125 = vmatprep.subr.bf16.mxu0 %v1464
        %2126 = vmatpush1.bf16.msra.mxu0 %v1463
        %2127 = vmatprep.subr.bf16.mxu0 %v1472
        %2128 = vmatpush1.bf16.msra.mxu0 %v1471
        %2129 = vmatprep.subr.bf16.mxu0 %v1480
        %2130 = vmatpush1.bf16.msra.mxu0 %v1479
        %2131 = vmatprep.subr.bf16.mxu0 %v1488
        %2132 = vmatpush1.bf16.msra.mxu0 %v1487
        %2133 = vmatprep.subr.bf16.mxu0 %v1496
        %2134 = vmatpush1.bf16.msra.mxu0 %v1495
        %2135 = vmatprep.subr.bf16.mxu0 %v1504
        %2136 = vmatpush1.bf16.msra.mxu0 %v1503
        %2137 = vmatprep.subr.bf16.mxu0 %v1512
        %2138 = vmatpush1.bf16.msra.mxu0 %v1511
        %2139 = vmatprep.subr.bf16.mxu0 %v1520
        %2140 = vmatpush1.bf16.msra.mxu0 %v1519
        %2141 = vmatprep.subr.bf16.mxu0 %v1528
        %2142 = vmatpush1.bf16.msra.mxu0 %v1527
        %2143 = vmatprep.subr.bf16.mxu0 %v1536
        %2144 = vmatpush1.bf16.msra.mxu0 %v1535
        %2145 = vmatprep.subr.bf16.mxu0 %v1544
        %2146 = vmatpush1.bf16.msra.mxu0 %v1543
        %2147 = vmatprep.subr.bf16.mxu0 %v1552
        %2148 = vmatpush1.bf16.msra.mxu0 %v1551
        %2149 = vmatprep.subr.bf16.mxu0 %v1560
        %2150 = vmatpush1.bf16.msra.mxu0 %v1559
        %2151 = vmatprep.mubr.bf16.mxu0 %v660
        %2152 = vmatmul.mubr.bf16.gmra.mrb[0].mxu0 %v659
        %v2153 = vpop.f32.mrb[0].mxu0
        %v2154 = vadd.f32 0.0, %v2153
        %v2155 = vpop.f32.mrb[0].mxu0
        %v2156 = vadd.f32 0.0, %v2155
        %v2157 = vpop.f32.mrb[0].mxu0
        %v2158 = vadd.f32 0.0, %v2157
        %v2159 = vpop.f32.mrb[0].mxu0
        %v2160 = vadd.f32 0.0, %v2159
        %2161 = vdwg.mxu0
        %2162 = vmatprep.subr.bf16.mxu0 %v1568
        %2163 = vmatpush1.bf16.msra.mxu0 %v1567
        %2164 = vmatprep.subr.bf16.mxu0 %v1576
        %2165 = vmatpush1.bf16.msra.mxu0 %v1575
        %2166 = vmatprep.subr.bf16.mxu0 %v1584
        %2167 = vmatpush1.bf16.msra.mxu0 %v1583
        %2168 = vmatprep.subr.bf16.mxu0 %v1592
        %2169 = vmatpush1.bf16.msra.mxu0 %v1591
        %2170 = vmatprep.subr.bf16.mxu0 %v1600
        %2171 = vmatpush1.bf16.msra.mxu0 %v1599
        %2172 = vmatprep.subr.bf16.mxu0 %v1608
        %2173 = vmatpush1.bf16.msra.mxu0 %v1607
        %2174 = vmatprep.subr.bf16.mxu0 %v1616
        %2175 = vmatpush1.bf16.msra.mxu0 %v1615
        %2176 = vmatprep.subr.bf16.mxu0 %v1624
        %2177 = vmatpush1.bf16.msra.mxu0 %v1623
        %2178 = vmatprep.subr.bf16.mxu0 %v1632
        %2179 = vmatpush1.bf16.msra.mxu0 %v1631
        %2180 = vmatprep.subr.bf16.mxu0 %v1640
        %2181 = vmatpush1.bf16.msra.mxu0 %v1639
        %2182 = vmatprep.subr.bf16.mxu0 %v1648
        %2183 = vmatpush1.bf16.msra.mxu0 %v1647
        %2184 = vmatprep.subr.bf16.mxu0 %v1656
        %2185 = vmatpush1.bf16.msra.mxu0 %v1655
        %2186 = vmatprep.subr.bf16.mxu0 %v1664
        %2187 = vmatpush1.bf16.msra.mxu0 %v1663
        %2188 = vmatprep.subr.bf16.mxu0 %v1672
        %2189 = vmatpush1.bf16.msra.mxu0 %v1671
        %2190 = vmatprep.subr.bf16.mxu0 %v1680
        %2191 = vmatpush1.bf16.msra.mxu0 %v1679
        %2192 = vmatprep.subr.bf16.mxu0 %v1688
        %2193 = vmatpush1.bf16.msra.mxu0 %v1687
        %2194 = vmatprep.mubr.bf16.mxu0 %v662
        %2195 = vmatmul.mubr.bf16.gmra.mrb[0].mxu0 %v661
        %v2196 = vpop.f32.mrb[0].mxu0
        %v2197 = vadd.f32 %v2154, %v2196
        %v2198 = vpop.f32.mrb[0].mxu0
        %v2199 = vadd.f32 %v2156, %v2198
        %v2200 = vpop.f32.mrb[0].mxu0
        %v2201 = vadd.f32 %v2158, %v2200
        %v2202 = vpop.f32.mrb[0].mxu0
        %v2203 = vadd.f32 %v2160, %v2202
        %2204 = vdwg.mxu0
        %2205 = vmatprep.subr.bf16.mxu0 %v1442
        %2206 = vmatpush1.bf16.msra.mxu0 %v1441
        %2207 = vmatprep.subr.bf16.mxu0 %v1450
        %2208 = vmatpush1.bf16.msra.mxu0 %v1449
        %2209 = vmatprep.subr.bf16.mxu0 %v1458
        %2210 = vmatpush1.bf16.msra.mxu0 %v1457
        %2211 = vmatprep.subr.bf16.mxu0 %v1466
        %2212 = vmatpush1.bf16.msra.mxu0 %v1465
        %2213 = vmatprep.subr.bf16.mxu0 %v1474
        %2214 = vmatpush1.bf16.msra.mxu0 %v1473
        %2215 = vmatprep.subr.bf16.mxu0 %v1482
        %2216 = vmatpush1.bf16.msra.mxu0 %v1481
        %2217 = vmatprep.subr.bf16.mxu0 %v1490
        %2218 = vmatpush1.bf16.msra.mxu0 %v1489
        %2219 = vmatprep.subr.bf16.mxu0 %v1498
        %2220 = vmatpush1.bf16.msra.mxu0 %v1497
        %2221 = vmatprep.subr.bf16.mxu0 %v1506
        %2222 = vmatpush1.bf16.msra.mxu0 %v1505
        %2223 = vmatprep.subr.bf16.mxu0 %v1514
        %2224 = vmatpush1.bf16.msra.mxu0 %v1513
        %2225 = vmatprep.subr.bf16.mxu0 %v1522
        %2226 = vmatpush1.bf16.msra.mxu0 %v1521
        %2227 = vmatprep.subr.bf16.mxu0 %v1530
        %2228 = vmatpush1.bf16.msra.mxu0 %v1529
        %2229 = vmatprep.subr.bf16.mxu0 %v1538
        %2230 = vmatpush1.bf16.msra.mxu0 %v1537
        %2231 = vmatprep.subr.bf16.mxu0 %v1546
        %2232 = vmatpush1.bf16.msra.mxu0 %v1545
        %2233 = vmatprep.subr.bf16.mxu0 %v1554
        %2234 = vmatpush1.bf16.msra.mxu0 %v1553
        %2235 = vmatprep.subr.bf16.mxu0 %v1562
        %2236 = vmatpush1.bf16.msra.mxu0 %v1561
        %2237 = vmatprep.mubr.bf16.mxu0 %v660
        %2238 = vmatmul.mubr.bf16.gmra.mrb[0].mxu0 %v659
        %v2239 = vpop.f32.mrb[0].mxu0
        %v2240 = vadd.f32 0.0, %v2239
        %v2241 = vpop.f32.mrb[0].mxu0
        %v2242 = vadd.f32 0.0, %v2241
        %v2243 = vpop.f32.mrb[0].mxu0
        %v2244 = vadd.f32 0.0, %v2243
        %v2245 = vpop.f32.mrb[0].mxu0
        %v2246 = vadd.f32 0.0, %v2245
        %2247 = vdwg.mxu0
        %2248 = vmatprep.subr.bf16.mxu0 %v1570
        %2249 = vmatpush1.bf16.msra.mxu0 %v1569
        %2250 = vmatprep.subr.bf16.mxu0 %v1578
        %2251 = vmatpush1.bf16.msra.mxu0 %v1577
        %2252 = vmatprep.subr.bf16.mxu0 %v1586
        %2253 = vmatpush1.bf16.msra.mxu0 %v1585
        %2254 = vmatprep.subr.bf16.mxu0 %v1594
        %2255 = vmatpush1.bf16.msra.mxu0 %v1593
        %2256 = vmatprep.subr.bf16.mxu0 %v1602
        %2257 = vmatpush1.bf16.msra.mxu0 %v1601
        %2258 = vmatprep.subr.bf16.mxu0 %v1610
        %2259 = vmatpush1.bf16.msra.mxu0 %v1609
        %2260 = vmatprep.subr.bf16.mxu0 %v1618
        %2261 = vmatpush1.bf16.msra.mxu0 %v1617
        %2262 = vmatprep.subr.bf16.mxu0 %v1626
        %2263 = vmatpush1.bf16.msra.mxu0 %v1625
        %2264 = vmatprep.subr.bf16.mxu0 %v1634
        %2265 = vmatpush1.bf16.msra.mxu0 %v1633
        %2266 = vmatprep.subr.bf16.mxu0 %v1642
        %2267 = vmatpush1.bf16.msra.mxu0 %v1641
        %2268 = vmatprep.subr.bf16.mxu0 %v1650
        %2269 = vmatpush1.bf16.msra.mxu0 %v1649
        %2270 = vmatprep.subr.bf16.mxu0 %v1658
        %2271 = vmatpush1.bf16.msra.mxu0 %v1657
        %2272 = vmatprep.subr.bf16.mxu0 %v1666
        %2273 = vmatpush1.bf16.msra.mxu0 %v1665
        %2274 = vmatprep.subr.bf16.mxu0 %v1674
        %2275 = vmatpush1.bf16.msra.mxu0 %v1673
        %2276 = vmatprep.subr.bf16.mxu0 %v1682
        %2277 = vmatpush1.bf16.msra.mxu0 %v1681
        %2278 = vmatprep.subr.bf16.mxu0 %v1690
        %2279 = vmatpush1.bf16.msra.mxu0 %v1689
        %2280 = vmatprep.mubr.bf16.mxu0 %v662
        %2281 = vmatmul.mubr.bf16.gmra.mrb[0].mxu0 %v661
        %v2282 = vpop.f32.mrb[0].mxu0
        %v2283 = vadd.f32 %v2240, %v2282
        %v2284 = vpop.f32.mrb[0].mxu0
        %v2285 = vadd.f32 %v2242, %v2284
        %v2286 = vpop.f32.mrb[0].mxu0
        %v2287 = vadd.f32 %v2244, %v2286
        %v2288 = vpop.f32.mrb[0].mxu0
        %v2289 = vadd.f32 %v2246, %v2288
        %2290 = vdwg.mxu0
        %v2291 = vadd.f32 %v371, %v2025
        %v2292 = vadd.f32 %v372, %v2027
        %v2293 = vadd.f32 %v373, %v2111
        %v2294 = vadd.f32 %v374, %v2113
        %v2295 = vadd.f32 %v375, %v2197
        %v2296 = vadd.f32 %v376, %v2199
        %v2297 = vadd.f32 %v377, %v2283
        %v2298 = vadd.f32 %v378, %v2285
        %v2299 = vadd.f32 %v379, %v2029
        %v2300 = vadd.f32 %v380, %v2031
        %v2301 = vadd.f32 %v381, %v2115
        %v2302 = vadd.f32 %v382, %v2117
        %v2303 = vadd.f32 %v383, %v2201
        %v2304 = vadd.f32 %v384, %v2203
        %v2305 = vadd.f32 %v385, %v2287
        %v2306 = vadd.f32 %v386, %v2289
        %2307 = vst [vmem:[#allocation2] sm:$0xff] %v2291
        %2308 = vst [vmem:[#allocation2 + $0x8] sm:$0xff] %v2292
        %2309 = vst [vmem:[#allocation2 + $0x10] sm:$0xff] %v2293
        %2310 = vst [vmem:[#allocation2 + $0x18] sm:$0xff] %v2294
        %2311 = vst [vmem:[#allocation2 + $0x20] sm:$0xff] %v2295
        %2312 = vst [vmem:[#allocation2 + $0x28] sm:$0xff] %v2296
        %2313 = vst [vmem:[#allocation2 + $0x30] sm:$0xff] %v2297
        %2314 = vst [vmem:[#allocation2 + $0x38] sm:$0xff] %v2298
        %2315 = vst [vmem:[#allocation2 + $0x40] sm:$0xff] %v2299
        %2316 = vst [vmem:[#allocation2 + $0x48] sm:$0xff] %v2300
        %2317 = vst [vmem:[#allocation2 + $0x50] sm:$0xff] %v2301
        %2318 = vst [vmem:[#allocation2 + $0x58] sm:$0xff] %v2302
        %2319 = vst [vmem:[#allocation2 + $0x60] sm:$0xff] %v2303
        %2320 = vst [vmem:[#allocation2 + $0x68] sm:$0xff] %v2304
        %2321 = vst [vmem:[#allocation2 + $0x70] sm:$0xff] %v2305
        %2322 = vst [vmem:[#allocation2 + $0x78] sm:$0xff] %v2306
        %p2323 = scmp.eq.s32.totalorder %s23, 1
        // Predicated region
        $region76: #{mydnnnet_forward.1} parent=66 // pred_check
          %p2324 = pneg %p2323
        $region77: #{mydnnnet_forward.1} parent=66 // pred_check_branch
          %2326 = sbr.rel (%p2324) target = $region79
        $region78: #{mydnnnet_forward.1} parent=66 // pred_region
          %v2327 = vld [vmem:[#allocation2] sm:$0xff]
          %v2328 = vld [vmem:[#allocation2 + $0x8] sm:$0xff]
          %v2329 = vld [vmem:[#allocation2 + $0x10] sm:$0xff]
          %v2330 = vld [vmem:[#allocation2 + $0x18] sm:$0xff]
          %v2331 = vld [vmem:[#allocation2 + $0x20] sm:$0xff]
          %v2332 = vld [vmem:[#allocation2 + $0x28] sm:$0xff]
          %v2333 = vld [vmem:[#allocation2 + $0x30] sm:$0xff]
          %v2334 = vld [vmem:[#allocation2 + $0x38] sm:$0xff]
          %v2335 = vld [vmem:[#allocation2 + $0x40] sm:$0xff]
          %v2336 = vld [vmem:[#allocation2 + $0x48] sm:$0xff]
          %v2337 = vld [vmem:[#allocation2 + $0x50] sm:$0xff]
          %v2338 = vld [vmem:[#allocation2 + $0x58] sm:$0xff]
          %v2339 = vld [vmem:[#allocation2 + $0x60] sm:$0xff]
          %v2340 = vld [vmem:[#allocation2 + $0x68] sm:$0xff]
          %v2341 = vld [vmem:[#allocation2 + $0x70] sm:$0xff]
          %v2342 = vld [vmem:[#allocation2 + $0x78] sm:$0xff]
          %v2343 = vld [vmem:[%s2] sm:$0xff]
          %v2345 = vlaneseq
          %v2346 = vshrl.u32 %v2345, 7
          %v2347 = vsub.s32 0, %v2346
          %v2348 = vrot.slane %v2343, %v2347
          %v2349 = vlaneseq
          %v2350 = vshrl.u32 %v2349, 7
          %v2351 = vsub.s32 1, %v2350
          %v2352 = vrot.slane %v2343, %v2351
          %v2353 = vlaneseq
          %v2354 = vshrl.u32 %v2353, 7
          %v2355 = vsub.s32 2, %v2354
          %v2356 = vrot.slane %v2343, %v2355
          %v2357 = vlaneseq
          %v2358 = vshrl.u32 %v2357, 7
          %v2359 = vsub.s32 3, %v2358
          %v2360 = vrot.slane %v2343, %v2359
          %v2361 = vlaneseq
          %v2362 = vshrl.u32 %v2361, 7
          %v2363 = vsub.s32 4, %v2362
          %v2364 = vrot.slane %v2343, %v2363
          %v2365 = vlaneseq
          %v2366 = vshrl.u32 %v2365, 7
          %v2367 = vsub.s32 5, %v2366
          %v2368 = vrot.slane %v2343, %v2367
          %v2369 = vlaneseq
          %v2370 = vshrl.u32 %v2369, 7
          %v2371 = vsub.s32 6, %v2370
          %v2372 = vrot.slane %v2343, %v2371
          %v2373 = vlaneseq
          %v2374 = vshrl.u32 %v2373, 7
          %v2375 = vsub.s32 7, %v2374
          %v2376 = vrot.slane %v2343, %v2375
          %v2385 = vadd.f32 %v2327, %v2348
          %v2386 = vadd.f32 %v2328, %v2352
          %v2387 = vadd.f32 %v2329, %v2356
          %v2388 = vadd.f32 %v2330, %v2360
          %v2389 = vadd.f32 %v2331, %v2364
          %v2390 = vadd.f32 %v2332, %v2368
          %v2391 = vadd.f32 %v2333, %v2372
          %v2392 = vadd.f32 %v2334, %v2376
          %v2393 = vadd.f32 %v2335, %v2348
          %v2394 = vadd.f32 %v2336, %v2352
          %v2395 = vadd.f32 %v2337, %v2356
          %v2396 = vadd.f32 %v2338, %v2360
          %v2397 = vadd.f32 %v2339, %v2364
          %v2398 = vadd.f32 %v2340, %v2368
          %v2399 = vadd.f32 %v2341, %v2372
          %v2400 = vadd.f32 %v2342, %v2376
          %v2401 = vmax.f32 %v2385, 0.0
          %v2402 = vmax.f32 %v2386, 0.0
          %v2403 = vmax.f32 %v2387, 0.0
          %v2404 = vmax.f32 %v2388, 0.0
          %v2405 = vmax.f32 %v2389, 0.0
          %v2406 = vmax.f32 %v2390, 0.0
          %v2407 = vmax.f32 %v2391, 0.0
          %v2408 = vmax.f32 %v2392, 0.0
          %v2409 = vmax.f32 %v2393, 0.0
          %v2410 = vmax.f32 %v2394, 0.0
          %v2411 = vmax.f32 %v2395, 0.0
          %v2412 = vmax.f32 %v2396, 0.0
          %v2413 = vmax.f32 %v2397, 0.0
          %v2414 = vmax.f32 %v2398, 0.0
          %v2415 = vmax.f32 %v2399, 0.0
          %v2416 = vmax.f32 %v2400, 0.0
          %v2417 = vpack.c.bf16 %v2409, %v2401
          %v2418 = vpack.c.bf16 %v2410, %v2402
          %v2419 = vpack.c.bf16 %v2411, %v2403
          %v2420 = vpack.c.bf16 %v2412, %v2404
          %v2421 = vpack.c.bf16 %v2413, %v2405
          %v2422 = vpack.c.bf16 %v2414, %v2406
          %v2423 = vpack.c.bf16 %v2415, %v2407
          %v2424 = vpack.c.bf16 %v2416, %v2408
          %v2425 = vld [vmem:[%s3] sm:$0xff]
          %v2426 = vld [vmem:[%s3 + $0x8] sm:$0xff]
          %v2427 = vld [vmem:[%s3 + $0x10] sm:$0xff]
          %v2428 = vld [vmem:[%s3 + $0x18] sm:$0xff]
          %v2429 = vld [vmem:[%s3 + $0x20] sm:$0xff]
          %v2430 = vld [vmem:[%s3 + $0x28] sm:$0xff]
          %v2431 = vld [vmem:[%s3 + $0x30] sm:$0xff]
          %v2432 = vld [vmem:[%s3 + $0x38] sm:$0xff]
          %v2433 = vld [vmem:[%s3 + $0x40] sm:$0xff]
          %v2434 = vld [vmem:[%s3 + $0x48] sm:$0xff]
          %v2435 = vld [vmem:[%s3 + $0x50] sm:$0xff]
          %v2436 = vld [vmem:[%s3 + $0x58] sm:$0xff]
          %v2437 = vld [vmem:[%s3 + $0x60] sm:$0xff]
          %v2438 = vld [vmem:[%s3 + $0x68] sm:$0xff]
          %v2439 = vld [vmem:[%s3 + $0x70] sm:$0xff]
          %v2440 = vld [vmem:[%s3 + $0x78] sm:$0xff]
          %v2441 = vld [vmem:[%s3 + $0x80] sm:$0xff]
          %v2442 = vld [vmem:[%s3 + $0x88] sm:$0xff]
          %v2443 = vld [vmem:[%s3 + $0x90] sm:$0xff]
          %v2444 = vld [vmem:[%s3 + $0x98] sm:$0xff]
          %v2445 = vld [vmem:[%s3 + $0xa0] sm:$0xff]
          %v2446 = vld [vmem:[%s3 + $0xa8] sm:$0xff]
          %v2447 = vld [vmem:[%s3 + $0xb0] sm:$0xff]
          %v2448 = vld [vmem:[%s3 + $0xb8] sm:$0xff]
          %v2449 = vld [vmem:[%s3 + $0xc0] sm:$0xff]
          %v2450 = vld [vmem:[%s3 + $0xc8] sm:$0xff]
          %v2451 = vld [vmem:[%s3 + $0xd0] sm:$0xff]
          %v2452 = vld [vmem:[%s3 + $0xd8] sm:$0xff]
          %v2453 = vld [vmem:[%s3 + $0xe0] sm:$0xff]
          %v2454 = vld [vmem:[%s3 + $0xe8] sm:$0xff]
          %v2455 = vld [vmem:[%s3 + $0xf0] sm:$0xff]
          %v2456 = vld [vmem:[%s3 + $0xf8] sm:$0xff]
          %v2457 = vld [vmem:[%s3 + $0x100] sm:$0xff]
          %v2458 = vld [vmem:[%s3 + $0x108] sm:$0xff]
          %v2459 = vld [vmem:[%s3 + $0x110] sm:$0xff]
          %v2460 = vld [vmem:[%s3 + $0x118] sm:$0xff]
          %v2461 = vld [vmem:[%s3 + $0x120] sm:$0xff]
          %v2462 = vld [vmem:[%s3 + $0x128] sm:$0xff]
          %v2463 = vld [vmem:[%s3 + $0x130] sm:$0xff]
          %v2464 = vld [vmem:[%s3 + $0x138] sm:$0xff]
          %v2465 = vld [vmem:[%s3 + $0x140] sm:$0xff]
          %v2466 = vld [vmem:[%s3 + $0x148] sm:$0xff]
          %v2467 = vld [vmem:[%s3 + $0x150] sm:$0xff]
          %v2468 = vld [vmem:[%s3 + $0x158] sm:$0xff]
          %v2469 = vld [vmem:[%s3 + $0x160] sm:$0xff]
          %v2470 = vld [vmem:[%s3 + $0x168] sm:$0xff]
          %v2471 = vld [vmem:[%s3 + $0x170] sm:$0xff]
          %v2472 = vld [vmem:[%s3 + $0x178] sm:$0xff]
          %v2473 = vld [vmem:[%s3 + $0x180] sm:$0xff]
          %v2474 = vld [vmem:[%s3 + $0x188] sm:$0xff]
          %v2475 = vld [vmem:[%s3 + $0x190] sm:$0xff]
          %v2476 = vld [vmem:[%s3 + $0x198] sm:$0xff]
          %v2477 = vld [vmem:[%s3 + $0x1a0] sm:$0xff]
          %v2478 = vld [vmem:[%s3 + $0x1a8] sm:$0xff]
          %v2479 = vld [vmem:[%s3 + $0x1b0] sm:$0xff]
          %v2480 = vld [vmem:[%s3 + $0x1b8] sm:$0xff]
          %v2481 = vld [vmem:[%s3 + $0x1c0] sm:$0xff]
          %v2482 = vld [vmem:[%s3 + $0x1c8] sm:$0xff]
          %v2483 = vld [vmem:[%s3 + $0x1d0] sm:$0xff]
          %v2484 = vld [vmem:[%s3 + $0x1d8] sm:$0xff]
          %v2485 = vld [vmem:[%s3 + $0x1e0] sm:$0xff]
          %v2486 = vld [vmem:[%s3 + $0x1e8] sm:$0xff]
          %v2487 = vld [vmem:[%s3 + $0x1f0] sm:$0xff]
          %v2488 = vld [vmem:[%s3 + $0x1f8] sm:$0xff]
          %v2489 = vld [vmem:[%s3 + $0x200] sm:$0xff]
          %v2490 = vld [vmem:[%s3 + $0x208] sm:$0xff]
          %v2491 = vld [vmem:[%s3 + $0x210] sm:$0xff]
          %v2492 = vld [vmem:[%s3 + $0x218] sm:$0xff]
          %v2493 = vld [vmem:[%s3 + $0x220] sm:$0xff]
          %v2494 = vld [vmem:[%s3 + $0x228] sm:$0xff]
          %v2495 = vld [vmem:[%s3 + $0x230] sm:$0xff]
          %v2496 = vld [vmem:[%s3 + $0x238] sm:$0xff]
          %v2497 = vld [vmem:[%s3 + $0x240] sm:$0xff]
          %v2498 = vld [vmem:[%s3 + $0x248] sm:$0xff]
          %v2499 = vld [vmem:[%s3 + $0x250] sm:$0xff]
          %v2500 = vld [vmem:[%s3 + $0x258] sm:$0xff]
          %v2501 = vld [vmem:[%s3 + $0x260] sm:$0xff]
          %v2502 = vld [vmem:[%s3 + $0x268] sm:$0xff]
          %v2503 = vld [vmem:[%s3 + $0x270] sm:$0xff]
          %v2504 = vld [vmem:[%s3 + $0x278] sm:$0xff]
          %v2505 = vld [vmem:[%s3 + $0x280] sm:$0xff]
          %v2506 = vld [vmem:[%s3 + $0x288] sm:$0xff]
          %v2507 = vld [vmem:[%s3 + $0x290] sm:$0xff]
          %v2508 = vld [vmem:[%s3 + $0x298] sm:$0xff]
          %v2509 = vld [vmem:[%s3 + $0x2a0] sm:$0xff]
          %v2510 = vld [vmem:[%s3 + $0x2a8] sm:$0xff]
          %v2511 = vld [vmem:[%s3 + $0x2b0] sm:$0xff]
          %v2512 = vld [vmem:[%s3 + $0x2b8] sm:$0xff]
          %v2513 = vld [vmem:[%s3 + $0x2c0] sm:$0xff]
          %v2514 = vld [vmem:[%s3 + $0x2c8] sm:$0xff]
          %v2515 = vld [vmem:[%s3 + $0x2d0] sm:$0xff]
          %v2516 = vld [vmem:[%s3 + $0x2d8] sm:$0xff]
          %v2517 = vld [vmem:[%s3 + $0x2e0] sm:$0xff]
          %v2518 = vld [vmem:[%s3 + $0x2e8] sm:$0xff]
          %v2519 = vld [vmem:[%s3 + $0x2f0] sm:$0xff]
          %v2520 = vld [vmem:[%s3 + $0x2f8] sm:$0xff]
          %v2521 = vld [vmem:[%s3 + $0x300] sm:$0xff]
          %v2522 = vld [vmem:[%s3 + $0x308] sm:$0xff]
          %v2523 = vld [vmem:[%s3 + $0x310] sm:$0xff]
          %v2524 = vld [vmem:[%s3 + $0x318] sm:$0xff]
          %v2525 = vld [vmem:[%s3 + $0x320] sm:$0xff]
          %v2526 = vld [vmem:[%s3 + $0x328] sm:$0xff]
          %v2527 = vld [vmem:[%s3 + $0x330] sm:$0xff]
          %v2528 = vld [vmem:[%s3 + $0x338] sm:$0xff]
          %v2529 = vld [vmem:[%s3 + $0x340] sm:$0xff]
          %v2530 = vld [vmem:[%s3 + $0x348] sm:$0xff]
          %v2531 = vld [vmem:[%s3 + $0x350] sm:$0xff]
          %v2532 = vld [vmem:[%s3 + $0x358] sm:$0xff]
          %v2533 = vld [vmem:[%s3 + $0x360] sm:$0xff]
          %v2534 = vld [vmem:[%s3 + $0x368] sm:$0xff]
          %v2535 = vld [vmem:[%s3 + $0x370] sm:$0xff]
          %v2536 = vld [vmem:[%s3 + $0x378] sm:$0xff]
          %v2537 = vld [vmem:[%s3 + $0x380] sm:$0xff]
          %v2538 = vld [vmem:[%s3 + $0x388] sm:$0xff]
          %v2539 = vld [vmem:[%s3 + $0x390] sm:$0xff]
          %v2540 = vld [vmem:[%s3 + $0x398] sm:$0xff]
          %v2541 = vld [vmem:[%s3 + $0x3a0] sm:$0xff]
          %v2542 = vld [vmem:[%s3 + $0x3a8] sm:$0xff]
          %v2543 = vld [vmem:[%s3 + $0x3b0] sm:$0xff]
          %v2544 = vld [vmem:[%s3 + $0x3b8] sm:$0xff]
          %v2545 = vld [vmem:[%s3 + $0x3c0] sm:$0xff]
          %v2546 = vld [vmem:[%s3 + $0x3c8] sm:$0xff]
          %v2547 = vld [vmem:[%s3 + $0x3d0] sm:$0xff]
          %v2548 = vld [vmem:[%s3 + $0x3d8] sm:$0xff]
          %v2549 = vld [vmem:[%s3 + $0x3e0] sm:$0xff]
          %v2550 = vld [vmem:[%s3 + $0x3e8] sm:$0xff]
          %v2551 = vld [vmem:[%s3 + $0x3f0] sm:$0xff]
          %v2552 = vld [vmem:[%s3 + $0x3f8] sm:$0xff]
          %v2553 = vld [vmem:[%s4] sm:$0x3]
          %v2555 = vlaneseq
          %v2556 = vshrl.u32 %v2555, 7
          %v2557 = vsub.s32 0, %v2556
          %v2558 = vrot.slane %v2553, %v2557
          %v2559 = vlaneseq
          %v2560 = vshrl.u32 %v2559, 7
          %v2561 = vsub.s32 1, %v2560
          %v2562 = vrot.slane %v2553, %v2561
          %v2693 = vunpack.c.l.b16 %v2425
          %v2694 = vunpack.c.h.b16 %v2425
          %v2695 = vunpack.c.l.b16 %v2426
          %v2696 = vunpack.c.h.b16 %v2426
          %v2697 = vunpack.c.l.b16 %v2427
          %v2698 = vunpack.c.h.b16 %v2427
          %v2699 = vunpack.c.l.b16 %v2428
          %v2700 = vunpack.c.h.b16 %v2428
          %v2701 = vunpack.c.l.b16 %v2429
          %v2702 = vunpack.c.h.b16 %v2429
          %v2703 = vunpack.c.l.b16 %v2430
          %v2704 = vunpack.c.h.b16 %v2430
          %v2705 = vunpack.c.l.b16 %v2431
          %v2706 = vunpack.c.h.b16 %v2431
          %v2707 = vunpack.c.l.b16 %v2432
          %v2708 = vunpack.c.h.b16 %v2432
          %v2709 = vunpack.c.l.b16 %v2433
          %v2710 = vunpack.c.h.b16 %v2433
          %v2711 = vunpack.c.l.b16 %v2434
          %v2712 = vunpack.c.h.b16 %v2434
          %v2713 = vunpack.c.l.b16 %v2435
          %v2714 = vunpack.c.h.b16 %v2435
          %v2715 = vunpack.c.l.b16 %v2436
          %v2716 = vunpack.c.h.b16 %v2436
          %v2717 = vunpack.c.l.b16 %v2437
          %v2718 = vunpack.c.h.b16 %v2437
          %v2719 = vunpack.c.l.b16 %v2438
          %v2720 = vunpack.c.h.b16 %v2438
          %v2721 = vunpack.c.l.b16 %v2439
          %v2722 = vunpack.c.h.b16 %v2439
          %v2723 = vunpack.c.l.b16 %v2440
          %v2724 = vunpack.c.h.b16 %v2440
          %v2725 = vunpack.c.l.b16 %v2441
          %v2726 = vunpack.c.h.b16 %v2441
          %v2727 = vunpack.c.l.b16 %v2442
          %v2728 = vunpack.c.h.b16 %v2442
          %v2729 = vunpack.c.l.b16 %v2443
          %v2730 = vunpack.c.h.b16 %v2443
          %v2731 = vunpack.c.l.b16 %v2444
          %v2732 = vunpack.c.h.b16 %v2444
          %v2733 = vunpack.c.l.b16 %v2445
          %v2734 = vunpack.c.h.b16 %v2445
          %v2735 = vunpack.c.l.b16 %v2446
          %v2736 = vunpack.c.h.b16 %v2446
          %v2737 = vunpack.c.l.b16 %v2447
          %v2738 = vunpack.c.h.b16 %v2447
          %v2739 = vunpack.c.l.b16 %v2448
          %v2740 = vunpack.c.h.b16 %v2448
          %v2741 = vunpack.c.l.b16 %v2449
          %v2742 = vunpack.c.h.b16 %v2449
          %v2743 = vunpack.c.l.b16 %v2450
          %v2744 = vunpack.c.h.b16 %v2450
          %v2745 = vunpack.c.l.b16 %v2451
          %v2746 = vunpack.c.h.b16 %v2451
          %v2747 = vunpack.c.l.b16 %v2452
          %v2748 = vunpack.c.h.b16 %v2452
          %v2749 = vunpack.c.l.b16 %v2453
          %v2750 = vunpack.c.h.b16 %v2453
          %v2751 = vunpack.c.l.b16 %v2454
          %v2752 = vunpack.c.h.b16 %v2454
          %v2753 = vunpack.c.l.b16 %v2455
          %v2754 = vunpack.c.h.b16 %v2455
          %v2755 = vunpack.c.l.b16 %v2456
          %v2756 = vunpack.c.h.b16 %v2456
          %v2757 = vunpack.c.l.b16 %v2457
          %v2758 = vunpack.c.h.b16 %v2457
          %v2759 = vunpack.c.l.b16 %v2458
          %v2760 = vunpack.c.h.b16 %v2458
          %v2761 = vunpack.c.l.b16 %v2459
          %v2762 = vunpack.c.h.b16 %v2459
          %v2763 = vunpack.c.l.b16 %v2460
          %v2764 = vunpack.c.h.b16 %v2460
          %v2765 = vunpack.c.l.b16 %v2461
          %v2766 = vunpack.c.h.b16 %v2461
          %v2767 = vunpack.c.l.b16 %v2462
          %v2768 = vunpack.c.h.b16 %v2462
          %v2769 = vunpack.c.l.b16 %v2463
          %v2770 = vunpack.c.h.b16 %v2463
          %v2771 = vunpack.c.l.b16 %v2464
          %v2772 = vunpack.c.h.b16 %v2464
          %v2773 = vunpack.c.l.b16 %v2465
          %v2774 = vunpack.c.h.b16 %v2465
          %v2775 = vunpack.c.l.b16 %v2466
          %v2776 = vunpack.c.h.b16 %v2466
          %v2777 = vunpack.c.l.b16 %v2467
          %v2778 = vunpack.c.h.b16 %v2467
          %v2779 = vunpack.c.l.b16 %v2468
          %v2780 = vunpack.c.h.b16 %v2468
          %v2781 = vunpack.c.l.b16 %v2469
          %v2782 = vunpack.c.h.b16 %v2469
          %v2783 = vunpack.c.l.b16 %v2470
          %v2784 = vunpack.c.h.b16 %v2470
          %v2785 = vunpack.c.l.b16 %v2471
          %v2786 = vunpack.c.h.b16 %v2471
          %v2787 = vunpack.c.l.b16 %v2472
          %v2788 = vunpack.c.h.b16 %v2472
          %v2789 = vunpack.c.l.b16 %v2473
          %v2790 = vunpack.c.h.b16 %v2473
          %v2791 = vunpack.c.l.b16 %v2474
          %v2792 = vunpack.c.h.b16 %v2474
          %v2793 = vunpack.c.l.b16 %v2475
          %v2794 = vunpack.c.h.b16 %v2475
          %v2795 = vunpack.c.l.b16 %v2476
          %v2796 = vunpack.c.h.b16 %v2476
          %v2797 = vunpack.c.l.b16 %v2477
          %v2798 = vunpack.c.h.b16 %v2477
          %v2799 = vunpack.c.l.b16 %v2478
          %v2800 = vunpack.c.h.b16 %v2478
          %v2801 = vunpack.c.l.b16 %v2479
          %v2802 = vunpack.c.h.b16 %v2479
          %v2803 = vunpack.c.l.b16 %v2480
          %v2804 = vunpack.c.h.b16 %v2480
          %v2805 = vunpack.c.l.b16 %v2481
          %v2806 = vunpack.c.h.b16 %v2481
          %v2807 = vunpack.c.l.b16 %v2482
          %v2808 = vunpack.c.h.b16 %v2482
          %v2809 = vunpack.c.l.b16 %v2483
          %v2810 = vunpack.c.h.b16 %v2483
          %v2811 = vunpack.c.l.b16 %v2484
          %v2812 = vunpack.c.h.b16 %v2484
          %v2813 = vunpack.c.l.b16 %v2485
          %v2814 = vunpack.c.h.b16 %v2485
          %v2815 = vunpack.c.l.b16 %v2486
          %v2816 = vunpack.c.h.b16 %v2486
          %v2817 = vunpack.c.l.b16 %v2487
          %v2818 = vunpack.c.h.b16 %v2487
          %v2819 = vunpack.c.l.b16 %v2488
          %v2820 = vunpack.c.h.b16 %v2488
          %v2821 = vunpack.c.l.b16 %v2489
          %v2822 = vunpack.c.h.b16 %v2489
          %v2823 = vunpack.c.l.b16 %v2490
          %v2824 = vunpack.c.h.b16 %v2490
          %v2825 = vunpack.c.l.b16 %v2491
          %v2826 = vunpack.c.h.b16 %v2491
          %v2827 = vunpack.c.l.b16 %v2492
          %v2828 = vunpack.c.h.b16 %v2492
          %v2829 = vunpack.c.l.b16 %v2493
          %v2830 = vunpack.c.h.b16 %v2493
          %v2831 = vunpack.c.l.b16 %v2494
          %v2832 = vunpack.c.h.b16 %v2494
          %v2833 = vunpack.c.l.b16 %v2495
          %v2834 = vunpack.c.h.b16 %v2495
          %v2835 = vunpack.c.l.b16 %v2496
          %v2836 = vunpack.c.h.b16 %v2496
          %v2837 = vunpack.c.l.b16 %v2497
          %v2838 = vunpack.c.h.b16 %v2497
          %v2839 = vunpack.c.l.b16 %v2498
          %v2840 = vunpack.c.h.b16 %v2498
          %v2841 = vunpack.c.l.b16 %v2499
          %v2842 = vunpack.c.h.b16 %v2499
          %v2843 = vunpack.c.l.b16 %v2500
          %v2844 = vunpack.c.h.b16 %v2500
          %v2845 = vunpack.c.l.b16 %v2501
          %v2846 = vunpack.c.h.b16 %v2501
          %v2847 = vunpack.c.l.b16 %v2502
          %v2848 = vunpack.c.h.b16 %v2502
          %v2849 = vunpack.c.l.b16 %v2503
          %v2850 = vunpack.c.h.b16 %v2503
          %v2851 = vunpack.c.l.b16 %v2504
          %v2852 = vunpack.c.h.b16 %v2504
          %v2853 = vunpack.c.l.b16 %v2505
          %v2854 = vunpack.c.h.b16 %v2505
          %v2855 = vunpack.c.l.b16 %v2506
          %v2856 = vunpack.c.h.b16 %v2506
          %v2857 = vunpack.c.l.b16 %v2507
          %v2858 = vunpack.c.h.b16 %v2507
          %v2859 = vunpack.c.l.b16 %v2508
          %v2860 = vunpack.c.h.b16 %v2508
          %v2861 = vunpack.c.l.b16 %v2509
          %v2862 = vunpack.c.h.b16 %v2509
          %v2863 = vunpack.c.l.b16 %v2510
          %v2864 = vunpack.c.h.b16 %v2510
          %v2865 = vunpack.c.l.b16 %v2511
          %v2866 = vunpack.c.h.b16 %v2511
          %v2867 = vunpack.c.l.b16 %v2512
          %v2868 = vunpack.c.h.b16 %v2512
          %v2869 = vunpack.c.l.b16 %v2513
          %v2870 = vunpack.c.h.b16 %v2513
          %v2871 = vunpack.c.l.b16 %v2514
          %v2872 = vunpack.c.h.b16 %v2514
          %v2873 = vunpack.c.l.b16 %v2515
          %v2874 = vunpack.c.h.b16 %v2515
          %v2875 = vunpack.c.l.b16 %v2516
          %v2876 = vunpack.c.h.b16 %v2516
          %v2877 = vunpack.c.l.b16 %v2517
          %v2878 = vunpack.c.h.b16 %v2517
          %v2879 = vunpack.c.l.b16 %v2518
          %v2880 = vunpack.c.h.b16 %v2518
          %v2881 = vunpack.c.l.b16 %v2519
          %v2882 = vunpack.c.h.b16 %v2519
          %v2883 = vunpack.c.l.b16 %v2520
          %v2884 = vunpack.c.h.b16 %v2520
          %v2885 = vunpack.c.l.b16 %v2521
          %v2886 = vunpack.c.h.b16 %v2521
          %v2887 = vunpack.c.l.b16 %v2522
          %v2888 = vunpack.c.h.b16 %v2522
          %v2889 = vunpack.c.l.b16 %v2523
          %v2890 = vunpack.c.h.b16 %v2523
          %v2891 = vunpack.c.l.b16 %v2524
          %v2892 = vunpack.c.h.b16 %v2524
          %v2893 = vunpack.c.l.b16 %v2525
          %v2894 = vunpack.c.h.b16 %v2525
          %v2895 = vunpack.c.l.b16 %v2526
          %v2896 = vunpack.c.h.b16 %v2526
          %v2897 = vunpack.c.l.b16 %v2527
          %v2898 = vunpack.c.h.b16 %v2527
          %v2899 = vunpack.c.l.b16 %v2528
          %v2900 = vunpack.c.h.b16 %v2528
          %v2901 = vunpack.c.l.b16 %v2529
          %v2902 = vunpack.c.h.b16 %v2529
          %v2903 = vunpack.c.l.b16 %v2530
          %v2904 = vunpack.c.h.b16 %v2530
          %v2905 = vunpack.c.l.b16 %v2531
          %v2906 = vunpack.c.h.b16 %v2531
          %v2907 = vunpack.c.l.b16 %v2532
          %v2908 = vunpack.c.h.b16 %v2532
          %v2909 = vunpack.c.l.b16 %v2533
          %v2910 = vunpack.c.h.b16 %v2533
          %v2911 = vunpack.c.l.b16 %v2534
          %v2912 = vunpack.c.h.b16 %v2534
          %v2913 = vunpack.c.l.b16 %v2535
          %v2914 = vunpack.c.h.b16 %v2535
          %v2915 = vunpack.c.l.b16 %v2536
          %v2916 = vunpack.c.h.b16 %v2536
          %v2917 = vunpack.c.l.b16 %v2537
          %v2918 = vunpack.c.h.b16 %v2537
          %v2919 = vunpack.c.l.b16 %v2538
          %v2920 = vunpack.c.h.b16 %v2538
          %v2921 = vunpack.c.l.b16 %v2539
          %v2922 = vunpack.c.h.b16 %v2539
          %v2923 = vunpack.c.l.b16 %v2540
          %v2924 = vunpack.c.h.b16 %v2540
          %v2925 = vunpack.c.l.b16 %v2541
          %v2926 = vunpack.c.h.b16 %v2541
          %v2927 = vunpack.c.l.b16 %v2542
          %v2928 = vunpack.c.h.b16 %v2542
          %v2929 = vunpack.c.l.b16 %v2543
          %v2930 = vunpack.c.h.b16 %v2543
          %v2931 = vunpack.c.l.b16 %v2544
          %v2932 = vunpack.c.h.b16 %v2544
          %v2933 = vunpack.c.l.b16 %v2545
          %v2934 = vunpack.c.h.b16 %v2545
          %v2935 = vunpack.c.l.b16 %v2546
          %v2936 = vunpack.c.h.b16 %v2546
          %v2937 = vunpack.c.l.b16 %v2547
          %v2938 = vunpack.c.h.b16 %v2547
          %v2939 = vunpack.c.l.b16 %v2548
          %v2940 = vunpack.c.h.b16 %v2548
          %v2941 = vunpack.c.l.b16 %v2549
          %v2942 = vunpack.c.h.b16 %v2549
          %v2943 = vunpack.c.l.b16 %v2550
          %v2944 = vunpack.c.h.b16 %v2550
          %v2945 = vunpack.c.l.b16 %v2551
          %v2946 = vunpack.c.h.b16 %v2551
          %v2947 = vunpack.c.l.b16 %v2552
          %v2948 = vunpack.c.h.b16 %v2552
          %v2949 = vpack.c.b16 %v2695, %v2693
          %v2950 = vpack.c.b16 %v2696, %v2694
          %v2951 = vpack.c.b16 %v2699, %v2697
          %v2952 = vpack.c.b16 %v2700, %v2698
          %v2953 = vpack.c.b16 %v2703, %v2701
          %v2954 = vpack.c.b16 %v2704, %v2702
          %v2955 = vpack.c.b16 %v2707, %v2705
          %v2956 = vpack.c.b16 %v2708, %v2706
          %v2957 = vpack.c.b16 %v2711, %v2709
          %v2958 = vpack.c.b16 %v2712, %v2710
          %v2959 = vpack.c.b16 %v2715, %v2713
          %v2960 = vpack.c.b16 %v2716, %v2714
          %v2961 = vpack.c.b16 %v2719, %v2717
          %v2962 = vpack.c.b16 %v2720, %v2718
          %v2963 = vpack.c.b16 %v2723, %v2721
          %v2964 = vpack.c.b16 %v2724, %v2722
          %v2965 = vpack.c.b16 %v2727, %v2725
          %v2966 = vpack.c.b16 %v2728, %v2726
          %v2967 = vpack.c.b16 %v2731, %v2729
          %v2968 = vpack.c.b16 %v2732, %v2730
          %v2969 = vpack.c.b16 %v2735, %v2733
          %v2970 = vpack.c.b16 %v2736, %v2734
          %v2971 = vpack.c.b16 %v2739, %v2737
          %v2972 = vpack.c.b16 %v2740, %v2738
          %v2973 = vpack.c.b16 %v2743, %v2741
          %v2974 = vpack.c.b16 %v2744, %v2742
          %v2975 = vpack.c.b16 %v2747, %v2745
          %v2976 = vpack.c.b16 %v2748, %v2746
          %v2977 = vpack.c.b16 %v2751, %v2749
          %v2978 = vpack.c.b16 %v2752, %v2750
          %v2979 = vpack.c.b16 %v2755, %v2753
          %v2980 = vpack.c.b16 %v2756, %v2754
          %v2981 = vpack.c.b16 %v2759, %v2757
          %v2982 = vpack.c.b16 %v2760, %v2758
          %v2983 = vpack.c.b16 %v2763, %v2761
          %v2984 = vpack.c.b16 %v2764, %v2762
          %v2985 = vpack.c.b16 %v2767, %v2765
          %v2986 = vpack.c.b16 %v2768, %v2766
          %v2987 = vpack.c.b16 %v2771, %v2769
          %v2988 = vpack.c.b16 %v2772, %v2770
          %v2989 = vpack.c.b16 %v2775, %v2773
          %v2990 = vpack.c.b16 %v2776, %v2774
          %v2991 = vpack.c.b16 %v2779, %v2777
          %v2992 = vpack.c.b16 %v2780, %v2778
          %v2993 = vpack.c.b16 %v2783, %v2781
          %v2994 = vpack.c.b16 %v2784, %v2782
          %v2995 = vpack.c.b16 %v2787, %v2785
          %v2996 = vpack.c.b16 %v2788, %v2786
          %v2997 = vpack.c.b16 %v2791, %v2789
          %v2998 = vpack.c.b16 %v2792, %v2790
          %v2999 = vpack.c.b16 %v2795, %v2793
          %v3000 = vpack.c.b16 %v2796, %v2794
          %v3001 = vpack.c.b16 %v2799, %v2797
          %v3002 = vpack.c.b16 %v2800, %v2798
          %v3003 = vpack.c.b16 %v2803, %v2801
          %v3004 = vpack.c.b16 %v2804, %v2802
          %v3005 = vpack.c.b16 %v2807, %v2805
          %v3006 = vpack.c.b16 %v2808, %v2806
          %v3007 = vpack.c.b16 %v2811, %v2809
          %v3008 = vpack.c.b16 %v2812, %v2810
          %v3009 = vpack.c.b16 %v2815, %v2813
          %v3010 = vpack.c.b16 %v2816, %v2814
          %v3011 = vpack.c.b16 %v2819, %v2817
          %v3012 = vpack.c.b16 %v2820, %v2818
          %v3013 = vpack.c.b16 %v2823, %v2821
          %v3014 = vpack.c.b16 %v2824, %v2822
          %v3015 = vpack.c.b16 %v2827, %v2825
          %v3016 = vpack.c.b16 %v2828, %v2826
          %v3017 = vpack.c.b16 %v2831, %v2829
          %v3018 = vpack.c.b16 %v2832, %v2830
          %v3019 = vpack.c.b16 %v2835, %v2833
          %v3020 = vpack.c.b16 %v2836, %v2834
          %v3021 = vpack.c.b16 %v2839, %v2837
          %v3022 = vpack.c.b16 %v2840, %v2838
          %v3023 = vpack.c.b16 %v2843, %v2841
          %v3024 = vpack.c.b16 %v2844, %v2842
          %v3025 = vpack.c.b16 %v2847, %v2845
          %v3026 = vpack.c.b16 %v2848, %v2846
          %v3027 = vpack.c.b16 %v2851, %v2849
          %v3028 = vpack.c.b16 %v2852, %v2850
          %v3029 = vpack.c.b16 %v2855, %v2853
          %v3030 = vpack.c.b16 %v2856, %v2854
          %v3031 = vpack.c.b16 %v2859, %v2857
          %v3032 = vpack.c.b16 %v2860, %v2858
          %v3033 = vpack.c.b16 %v2863, %v2861
          %v3034 = vpack.c.b16 %v2864, %v2862
          %v3035 = vpack.c.b16 %v2867, %v2865
          %v3036 = vpack.c.b16 %v2868, %v2866
          %v3037 = vpack.c.b16 %v2871, %v2869
          %v3038 = vpack.c.b16 %v2872, %v2870
          %v3039 = vpack.c.b16 %v2875, %v2873
          %v3040 = vpack.c.b16 %v2876, %v2874
          %v3041 = vpack.c.b16 %v2879, %v2877
          %v3042 = vpack.c.b16 %v2880, %v2878
          %v3043 = vpack.c.b16 %v2883, %v2881
          %v3044 = vpack.c.b16 %v2884, %v2882
          %v3045 = vpack.c.b16 %v2887, %v2885
          %v3046 = vpack.c.b16 %v2888, %v2886
          %v3047 = vpack.c.b16 %v2891, %v2889
          %v3048 = vpack.c.b16 %v2892, %v2890
          %v3049 = vpack.c.b16 %v2895, %v2893
          %v3050 = vpack.c.b16 %v2896, %v2894
          %v3051 = vpack.c.b16 %v2899, %v2897
          %v3052 = vpack.c.b16 %v2900, %v2898
          %v3053 = vpack.c.b16 %v2903, %v2901
          %v3054 = vpack.c.b16 %v2904, %v2902
          %v3055 = vpack.c.b16 %v2907, %v2905
          %v3056 = vpack.c.b16 %v2908, %v2906
          %v3057 = vpack.c.b16 %v2911, %v2909
          %v3058 = vpack.c.b16 %v2912, %v2910
          %v3059 = vpack.c.b16 %v2915, %v2913
          %v3060 = vpack.c.b16 %v2916, %v2914
          %v3061 = vpack.c.b16 %v2919, %v2917
          %v3062 = vpack.c.b16 %v2920, %v2918
          %v3063 = vpack.c.b16 %v2923, %v2921
          %v3064 = vpack.c.b16 %v2924, %v2922
          %v3065 = vpack.c.b16 %v2927, %v2925
          %v3066 = vpack.c.b16 %v2928, %v2926
          %v3067 = vpack.c.b16 %v2931, %v2929
          %v3068 = vpack.c.b16 %v2932, %v2930
          %v3069 = vpack.c.b16 %v2935, %v2933
          %v3070 = vpack.c.b16 %v2936, %v2934
          %v3071 = vpack.c.b16 %v2939, %v2937
          %v3072 = vpack.c.b16 %v2940, %v2938
          %v3073 = vpack.c.b16 %v2943, %v2941
          %v3074 = vpack.c.b16 %v2944, %v2942
          %v3075 = vpack.c.b16 %v2947, %v2945
          %v3076 = vpack.c.b16 %v2948, %v2946
          %3205 = vmatprep.subr.bf16.mxu0 %v2950
          %3206 = vmatpush1.bf16.msra.mxu0 %v2949
          %3207 = vmatprep.subr.bf16.mxu0 %v2952
          %3208 = vmatpush1.bf16.msra.mxu0 %v2951
          %3209 = vmatprep.subr.bf16.mxu0 %v2954
          %3210 = vmatpush1.bf16.msra.mxu0 %v2953
          %3211 = vmatprep.subr.bf16.mxu0 %v2956
          %3212 = vmatpush1.bf16.msra.mxu0 %v2955
          %3213 = vmatprep.subr.bf16.mxu0 %v2958
          %3214 = vmatpush1.bf16.msra.mxu0 %v2957
          %3215 = vmatprep.subr.bf16.mxu0 %v2960
          %3216 = vmatpush1.bf16.msra.mxu0 %v2959
          %3217 = vmatprep.subr.bf16.mxu0 %v2962
          %3218 = vmatpush1.bf16.msra.mxu0 %v2961
          %3219 = vmatprep.subr.bf16.mxu0 %v2964
          %3220 = vmatpush1.bf16.msra.mxu0 %v2963
          %3221 = vmatprep.subr.bf16.mxu0 %v2966
          %3222 = vmatpush1.bf16.msra.mxu0 %v2965
          %3223 = vmatprep.subr.bf16.mxu0 %v2968
          %3224 = vmatpush1.bf16.msra.mxu0 %v2967
          %3225 = vmatprep.subr.bf16.mxu0 %v2970
          %3226 = vmatpush1.bf16.msra.mxu0 %v2969
          %3227 = vmatprep.subr.bf16.mxu0 %v2972
          %3228 = vmatpush1.bf16.msra.mxu0 %v2971
          %3229 = vmatprep.subr.bf16.mxu0 %v2974
          %3230 = vmatpush1.bf16.msra.mxu0 %v2973
          %3231 = vmatprep.subr.bf16.mxu0 %v2976
          %3232 = vmatpush1.bf16.msra.mxu0 %v2975
          %3233 = vmatprep.subr.bf16.mxu0 %v2978
          %3234 = vmatpush1.bf16.msra.mxu0 %v2977
          %3235 = vmatprep.subr.bf16.mxu0 %v2980
          %3236 = vmatpush1.bf16.msra.mxu0 %v2979
          %3237 = vmatprep.mubr.bf16.mxu0 %v2418
          %3238 = vmatmul.mubr.bf16.gmra.mrb[0].mxu0 %v2417
          %v3239 = vpop.f32.mrb[0].mxu0
          %v3240 = vadd.f32 %v2558, %v3239
          %v3241 = vpop.f32.mrb[0].mxu0
          %v3242 = vadd.f32 %v2562, %v3241
          %v3243 = vpop.f32.mrb[0].mxu0
          %v3244 = vadd.f32 %v2558, %v3243
          %v3245 = vpop.f32.mrb[0].mxu0
          %v3246 = vadd.f32 %v2562, %v3245
          %3247 = vdwg.mxu0
          %3248 = vmatprep.subr.bf16.mxu0 %v2982
          %3249 = vmatpush1.bf16.msra.mxu0 %v2981
          %3250 = vmatprep.subr.bf16.mxu0 %v2984
          %3251 = vmatpush1.bf16.msra.mxu0 %v2983
          %3252 = vmatprep.subr.bf16.mxu0 %v2986
          %3253 = vmatpush1.bf16.msra.mxu0 %v2985
          %3254 = vmatprep.subr.bf16.mxu0 %v2988
          %3255 = vmatpush1.bf16.msra.mxu0 %v2987
          %3256 = vmatprep.subr.bf16.mxu0 %v2990
          %3257 = vmatpush1.bf16.msra.mxu0 %v2989
          %3258 = vmatprep.subr.bf16.mxu0 %v2992
          %3259 = vmatpush1.bf16.msra.mxu0 %v2991
          %3260 = vmatprep.subr.bf16.mxu0 %v2994
          %3261 = vmatpush1.bf16.msra.mxu0 %v2993
          %3262 = vmatprep.subr.bf16.mxu0 %v2996
          %3263 = vmatpush1.bf16.msra.mxu0 %v2995
          %3264 = vmatprep.subr.bf16.mxu0 %v2998
          %3265 = vmatpush1.bf16.msra.mxu0 %v2997
          %3266 = vmatprep.subr.bf16.mxu0 %v3000
          %3267 = vmatpush1.bf16.msra.mxu0 %v2999
          %3268 = vmatprep.subr.bf16.mxu0 %v3002
          %3269 = vmatpush1.bf16.msra.mxu0 %v3001
          %3270 = vmatprep.subr.bf16.mxu0 %v3004
          %3271 = vmatpush1.bf16.msra.mxu0 %v3003
          %3272 = vmatprep.subr.bf16.mxu0 %v3006
          %3273 = vmatpush1.bf16.msra.mxu0 %v3005
          %3274 = vmatprep.subr.bf16.mxu0 %v3008
          %3275 = vmatpush1.bf16.msra.mxu0 %v3007
          %3276 = vmatprep.subr.bf16.mxu0 %v3010
          %3277 = vmatpush1.bf16.msra.mxu0 %v3009
          %3278 = vmatprep.subr.bf16.mxu0 %v3012
          %3279 = vmatpush1.bf16.msra.mxu0 %v3011
          %3280 = vmatprep.mubr.bf16.mxu0 %v2420
          %3281 = vmatmul.mubr.bf16.gmra.mrb[0].mxu0 %v2419
          %v3282 = vpop.f32.mrb[0].mxu0
          %v3283 = vadd.f32 %v3240, %v3282
          %v3284 = vpop.f32.mrb[0].mxu0
          %v3285 = vadd.f32 %v3242, %v3284
          %v3286 = vpop.f32.mrb[0].mxu0
          %v3287 = vadd.f32 %v3244, %v3286
          %v3288 = vpop.f32.mrb[0].mxu0
          %v3289 = vadd.f32 %v3246, %v3288
          %3290 = vdwg.mxu0
          %3291 = vmatprep.subr.bf16.mxu0 %v3014
          %3292 = vmatpush1.bf16.msra.mxu0 %v3013
          %3293 = vmatprep.subr.bf16.mxu0 %v3016
          %3294 = vmatpush1.bf16.msra.mxu0 %v3015
          %3295 = vmatprep.subr.bf16.mxu0 %v3018
          %3296 = vmatpush1.bf16.msra.mxu0 %v3017
          %3297 = vmatprep.subr.bf16.mxu0 %v3020
          %3298 = vmatpush1.bf16.msra.mxu0 %v3019
          %3299 = vmatprep.subr.bf16.mxu0 %v3022
          %3300 = vmatpush1.bf16.msra.mxu0 %v3021
          %3301 = vmatprep.subr.bf16.mxu0 %v3024
          %3302 = vmatpush1.bf16.msra.mxu0 %v3023
          %3303 = vmatprep.subr.bf16.mxu0 %v3026
          %3304 = vmatpush1.bf16.msra.mxu0 %v3025
          %3305 = vmatprep.subr.bf16.mxu0 %v3028
          %3306 = vmatpush1.bf16.msra.mxu0 %v3027
          %3307 = vmatprep.subr.bf16.mxu0 %v3030
          %3308 = vmatpush1.bf16.msra.mxu0 %v3029
          %3309 = vmatprep.subr.bf16.mxu0 %v3032
          %3310 = vmatpush1.bf16.msra.mxu0 %v3031
          %3311 = vmatprep.subr.bf16.mxu0 %v3034
          %3312 = vmatpush1.bf16.msra.mxu0 %v3033
          %3313 = vmatprep.subr.bf16.mxu0 %v3036
          %3314 = vmatpush1.bf16.msra.mxu0 %v3035
          %3315 = vmatprep.subr.bf16.mxu0 %v3038
          %3316 = vmatpush1.bf16.msra.mxu0 %v3037
          %3317 = vmatprep.subr.bf16.mxu0 %v3040
          %3318 = vmatpush1.bf16.msra.mxu0 %v3039
          %3319 = vmatprep.subr.bf16.mxu0 %v3042
          %3320 = vmatpush1.bf16.msra.mxu0 %v3041
          %3321 = vmatprep.subr.bf16.mxu0 %v3044
          %3322 = vmatpush1.bf16.msra.mxu0 %v3043
          %3323 = vmatprep.mubr.bf16.mxu0 %v2422
          %3324 = vmatmul.mubr.bf16.gmra.mrb[0].mxu0 %v2421
          %v3325 = vpop.f32.mrb[0].mxu0
          %v3326 = vadd.f32 %v3283, %v3325
          %v3327 = vpop.f32.mrb[0].mxu0
          %v3328 = vadd.f32 %v3285, %v3327
          %v3329 = vpop.f32.mrb[0].mxu0
          %v3330 = vadd.f32 %v3287, %v3329
          %v3331 = vpop.f32.mrb[0].mxu0
          %v3332 = vadd.f32 %v3289, %v3331
          %3333 = vdwg.mxu0
          %3334 = vmatprep.subr.bf16.mxu0 %v3046
          %3335 = vmatpush1.bf16.msra.mxu0 %v3045
          %3336 = vmatprep.subr.bf16.mxu0 %v3048
          %3337 = vmatpush1.bf16.msra.mxu0 %v3047
          %3338 = vmatprep.subr.bf16.mxu0 %v3050
          %3339 = vmatpush1.bf16.msra.mxu0 %v3049
          %3340 = vmatprep.subr.bf16.mxu0 %v3052
          %3341 = vmatpush1.bf16.msra.mxu0 %v3051
          %3342 = vmatprep.subr.bf16.mxu0 %v3054
          %3343 = vmatpush1.bf16.msra.mxu0 %v3053
          %3344 = vmatprep.subr.bf16.mxu0 %v3056
          %3345 = vmatpush1.bf16.msra.mxu0 %v3055
          %3346 = vmatprep.subr.bf16.mxu0 %v3058
          %3347 = vmatpush1.bf16.msra.mxu0 %v3057
          %3348 = vmatprep.subr.bf16.mxu0 %v3060
          %3349 = vmatpush1.bf16.msra.mxu0 %v3059
          %3350 = vmatprep.subr.bf16.mxu0 %v3062
          %3351 = vmatpush1.bf16.msra.mxu0 %v3061
          %3352 = vmatprep.subr.bf16.mxu0 %v3064
          %3353 = vmatpush1.bf16.msra.mxu0 %v3063
          %3354 = vmatprep.subr.bf16.mxu0 %v3066
          %3355 = vmatpush1.bf16.msra.mxu0 %v3065
          %3356 = vmatprep.subr.bf16.mxu0 %v3068
          %3357 = vmatpush1.bf16.msra.mxu0 %v3067
          %3358 = vmatprep.subr.bf16.mxu0 %v3070
          %3359 = vmatpush1.bf16.msra.mxu0 %v3069
          %3360 = vmatprep.subr.bf16.mxu0 %v3072
          %3361 = vmatpush1.bf16.msra.mxu0 %v3071
          %3362 = vmatprep.subr.bf16.mxu0 %v3074
          %3363 = vmatpush1.bf16.msra.mxu0 %v3073
          %3364 = vmatprep.subr.bf16.mxu0 %v3076
          %3365 = vmatpush1.bf16.msra.mxu0 %v3075
          %3366 = vmatprep.mubr.bf16.mxu0 %v2424
          %3367 = vmatmul.mubr.bf16.gmra.mrb[0].mxu0 %v2423
          %v3368 = vpop.f32.mrb[0].mxu0
          %v3369 = vadd.f32 %v3326, %v3368
          %v3370 = vpop.f32.mrb[0].mxu0
          %v3371 = vadd.f32 %v3328, %v3370
          %v3372 = vpop.f32.mrb[0].mxu0
          %v3373 = vadd.f32 %v3330, %v3372
          %v3374 = vpop.f32.mrb[0].mxu0
          %v3375 = vadd.f32 %v3332, %v3374
          %3376 = vdwg.mxu0
          %v3377 = vpack.c.bf16 %v3373, %v3369
          %v3378 = vpack.c.bf16 %v3375, %v3371
          %v3379 = vld [vmem:[%s5] sm:$0xf]
          %v3380 = vld [vmem:[%s5 + $0x4] sm:$0xf]
          %v3381 = vld [vmem:[%s5 + $0x8] sm:$0xf]
          %v3382 = vld [vmem:[%s5 + $0xc] sm:$0xf]
          %v3383 = vld [vmem:[%s5 + $0x10] sm:$0xf]
          %v3384 = vld [vmem:[%s5 + $0x14] sm:$0xf]
          %v3385 = vld [vmem:[%s5 + $0x18] sm:$0xf]
          %v3386 = vld [vmem:[%s5 + $0x1c] sm:$0xf]
          %v3387 = vld [vmem:[%s5 + $0x20] sm:$0xf]
          %v3388 = vld [vmem:[%s5 + $0x24] sm:$0xf]
          %v3389 = vld [vmem:[%s5 + $0x28] sm:$0xf]
          %v3390 = vld [vmem:[%s5 + $0x2c] sm:$0xf]
          %v3391 = vld [vmem:[%s5 + $0x30] sm:$0xf]
          %v3392 = vld [vmem:[%s5 + $0x34] sm:$0xf]
          %v3393 = vld [vmem:[%s5 + $0x38] sm:$0xf]
          %v3394 = vld [vmem:[%s5 + $0x3c] sm:$0xf]
          %v3395 = vld [vmem:[%s5 + $0x40] sm:$0xf]
          %v3396 = vld [vmem:[%s5 + $0x44] sm:$0xf]
          %v3397 = vld [vmem:[%s5 + $0x48] sm:$0xf]
          %v3398 = vld [vmem:[%s5 + $0x4c] sm:$0xf]
          %v3399 = vld [vmem:[%s5 + $0x50] sm:$0xf]
          %v3400 = vld [vmem:[%s5 + $0x54] sm:$0xf]
          %v3401 = vld [vmem:[%s5 + $0x58] sm:$0xf]
          %v3402 = vld [vmem:[%s5 + $0x5c] sm:$0xf]
          %v3403 = vld [vmem:[%s5 + $0x60] sm:$0xf]
          %v3404 = vld [vmem:[%s5 + $0x64] sm:$0xf]
          %v3405 = vld [vmem:[%s5 + $0x68] sm:$0xf]
          %v3406 = vld [vmem:[%s5 + $0x6c] sm:$0xf]
          %v3407 = vld [vmem:[%s5 + $0x70] sm:$0xf]
          %v3408 = vld [vmem:[%s5 + $0x74] sm:$0xf]
          %v3409 = vld [vmem:[%s5 + $0x78] sm:$0xf]
          %v3410 = vld [vmem:[%s5 + $0x7c] sm:$0xf]
          %v3411 = vld [vmem:[%s6] sm:$0x1]
          %v3413 = vlaneseq
          %v3414 = vshrl.u32 %v3413, 7
          %v3415 = vsub.s32 0, %v3414
          %v3416 = vrot.slane %v3411, %v3415
          %v3450 = vunpack.c.l.b16 %v3379
          %v3451 = vunpack.c.l.b16 %v3380
          %v3452 = vunpack.c.l.b16 %v3381
          %v3453 = vunpack.c.l.b16 %v3382
          %v3454 = vunpack.c.l.b16 %v3383
          %v3455 = vunpack.c.l.b16 %v3384
          %v3456 = vunpack.c.l.b16 %v3385
          %v3457 = vunpack.c.l.b16 %v3386
          %v3458 = vunpack.c.l.b16 %v3387
          %v3459 = vunpack.c.l.b16 %v3388
          %v3460 = vunpack.c.l.b16 %v3389
          %v3461 = vunpack.c.l.b16 %v3390
          %v3462 = vunpack.c.l.b16 %v3391
          %v3463 = vunpack.c.l.b16 %v3392
          %v3464 = vunpack.c.l.b16 %v3393
          %v3465 = vunpack.c.l.b16 %v3394
          %v3466 = vunpack.c.l.b16 %v3395
          %v3467 = vunpack.c.l.b16 %v3396
          %v3468 = vunpack.c.l.b16 %v3397
          %v3469 = vunpack.c.l.b16 %v3398
          %v3470 = vunpack.c.l.b16 %v3399
          %v3471 = vunpack.c.l.b16 %v3400
          %v3472 = vunpack.c.l.b16 %v3401
          %v3473 = vunpack.c.l.b16 %v3402
          %v3474 = vunpack.c.l.b16 %v3403
          %v3475 = vunpack.c.l.b16 %v3404
          %v3476 = vunpack.c.l.b16 %v3405
          %v3477 = vunpack.c.l.b16 %v3406
          %v3478 = vunpack.c.l.b16 %v3407
          %v3479 = vunpack.c.l.b16 %v3408
          %v3480 = vunpack.c.l.b16 %v3409
          %v3481 = vunpack.c.l.b16 %v3410
          %v3482 = vpack.c.b16 %v3451, %v3450
          %v3483 = vpack.c.b16 %v3453, %v3452
          %v3484 = vpack.c.b16 %v3455, %v3454
          %v3485 = vpack.c.b16 %v3457, %v3456
          %v3486 = vpack.c.b16 %v3459, %v3458
          %v3487 = vpack.c.b16 %v3461, %v3460
          %v3488 = vpack.c.b16 %v3463, %v3462
          %v3489 = vpack.c.b16 %v3465, %v3464
          %v3490 = vpack.c.b16 %v3467, %v3466
          %v3491 = vpack.c.b16 %v3469, %v3468
          %v3492 = vpack.c.b16 %v3471, %v3470
          %v3493 = vpack.c.b16 %v3473, %v3472
          %v3494 = vpack.c.b16 %v3475, %v3474
          %v3495 = vpack.c.b16 %v3477, %v3476
          %v3496 = vpack.c.b16 %v3479, %v3478
          %v3497 = vpack.c.b16 %v3481, %v3480
          %3514 = vmatprep.subr.bf16.mxu0 0
          %3515 = vmatpush1.bf16.msra.mxu0 %v3482
          %3516 = vmatprep.subr.bf16.mxu0 0
          %3517 = vmatpush1.bf16.msra.mxu0 %v3483
          %3518 = vmatprep.subr.bf16.mxu0 0
          %3519 = vmatpush1.bf16.msra.mxu0 %v3484
          %3520 = vmatprep.subr.bf16.mxu0 0
          %3521 = vmatpush1.bf16.msra.mxu0 %v3485
          %3522 = vmatprep.subr.bf16.mxu0 0
          %3523 = vmatpush1.bf16.msra.mxu0 %v3486
          %3524 = vmatprep.subr.bf16.mxu0 0
          %3525 = vmatpush1.bf16.msra.mxu0 %v3487
          %3526 = vmatprep.subr.bf16.mxu0 0
          %3527 = vmatpush1.bf16.msra.mxu0 %v3488
          %3528 = vmatprep.subr.bf16.mxu0 0
          %3529 = vmatpush1.bf16.msra.mxu0 %v3489
          %3530 = vmatprep.subr.bf16.mxu0 0
          %3531 = vmatpush1.bf16.msra.mxu0 %v3490
          %3532 = vmatprep.subr.bf16.mxu0 0
          %3533 = vmatpush1.bf16.msra.mxu0 %v3491
          %3534 = vmatprep.subr.bf16.mxu0 0
          %3535 = vmatpush1.bf16.msra.mxu0 %v3492
          %3536 = vmatprep.subr.bf16.mxu0 0
          %3537 = vmatpush1.bf16.msra.mxu0 %v3493
          %3538 = vmatprep.subr.bf16.mxu0 0
          %3539 = vmatpush1.bf16.msra.mxu0 %v3494
          %3540 = vmatprep.subr.bf16.mxu0 0
          %3541 = vmatpush1.bf16.msra.mxu0 %v3495
          %3542 = vmatprep.subr.bf16.mxu0 0
          %3543 = vmatpush1.bf16.msra.mxu0 %v3496
          %3544 = vmatprep.subr.bf16.mxu0 0
          %3545 = vmatpush1.bf16.msra.mxu0 %v3497
          %3546 = vmatprep.mubr.bf16.mxu0 %v3378
          %3547 = vmatmul.mubr.bf16.gmra.mrb[0].mxu0 %v3377
          %v3548 = vpop.f32.mrb[0].mxu0
          %v3549 = vadd.f32 %v3416, %v3548
          %v3550 = vpop.f32.mrb[0].mxu0
          %v3551 = vpop.f32.mrb[0].mxu0
          %v3552 = vadd.f32 %v3416, %v3551
          %v3553 = vpop.f32.mrb[0].mxu0
          %3554 = vdwg.mxu0
          %3555 = vst [vmem:[%s348] sm:$0xff] %v3549
          %3556 = vst [vmem:[%s348 + $0x8] sm:$0xff] %v3552
        $region79: #{mydnnnet_forward.1} parent=66 // pred_fallthru
          _
        %s3557 = smul.u32 2, %s22
        %p3558 = scmp.lt.s32.totalorder %s3557, 1
        %s3559 = scalar_select %p3558, %s3557, 1
        %s3560 = smul.addr %s3559, 8
        %s3561 = scalar_lea.vmem %s7, %s3560
        // Predicated region
        $region80: #{mydnnnet_forward.1} parent=66 // pred_check
          %p3562 = pneg %p207
        $region81: #{mydnnnet_forward.1} parent=66 // pred_check_branch
          %3564 = sbr.rel (%p3562) target = $region83
        $region82: #{mydnnnet_forward.1} parent=66 // pred_region
          %s3565 = smul.u32 2, %s22
        $region83: #{mydnnnet_forward.1} parent=66 // pred_fallthru
          _
        // Predicated region
        $region84: #{mydnnnet_forward.1} parent=66 // pred_check
          %p3566 = pneg %p207
        $region85: #{mydnnnet_forward.1} parent=66 // pred_check_branch
          %3568 = sbr.rel (%p3566) target = $region87
        $region86: #{mydnnnet_forward.1} parent=66 // pred_region
          %s3569 = smul.u32 2, %s22
          %p3570 = scmp.lt.s32.totalorder %s3569, 1
          %s3571 = scalar_select %p3570, %s3569, 1
          %s3572 = smul.addr %s3571, 8
          %s3573 = scalar_lea.vmem %s7, %s3572
        $region87: #{mydnnnet_forward.1} parent=66 // pred_fallthru
          _
      $region67: #{mydnnnet_forward.1} parent=5 // pred_fallthru
        _
      %p3574 = scmp.le.s32.totalorder 2, %s13
      // Predicated region
      $region88: #{mydnnnet_forward.1} parent=5 // pred_check
        %p3575 = pneg %p3574
      $region89: #{mydnnnet_forward.1} parent=5 // pred_check_branch
        %3577 = sbr.rel (%p3575) target = $region91
      $region90: #{mydnnnet_forward.1} parent=5 // pred_region
        %s3578 = ssub.s32 %s13, 2
      $region91: #{mydnnnet_forward.1} parent=5 // pred_fallthru
        _
    $region6: #{mydnnnet_forward.1} parent=1 // loop_footer
      %s17 = sadd.s32 1, %s13
    $region7: #{mydnnnet_forward.1} parent=1 // loop_footer_branch
      %12 = sbr.rel target = $region3
    $region8: #{mydnnnet_forward.1} parent=1 // loop_exit
      _

</llo_original>
